<compile_context>
chip_gen: v7x
topology: tpu7x:2x2x1
jax: 0.10.0
libtpu: 0.0.40
codegen_flags: <defaults>
</compile_context>

<pallas_src>
import jax
import jax.numpy as jnp
from jax import lax
from jax.experimental import pallas as pl
from jax.experimental.pallas import tpu as pltpu

ODE_STEPS = 4  # fixed-step Euler sub-steps per timestep


def _round_up(x, m):
    return ((x + m - 1) // m) * m


def _default_compute_dtype():
    """bf16 MXU operands (f32 accumulate) on v6e/v7x; keep f32 on v5e / unknown."""
    try:
        kind = jax.devices()[0].device_kind.lower()
    except Exception:
        return jnp.float32
    if any(tag in kind for tag in ("v6", "v7", "7x")):
        return jnp.bfloat16
    return jnp.float32


def _pick_tb(T, N, fin_pad, in_itemsize, budget_bytes=4 * 1024 * 1024):
    """Largest divisor of T that keeps >=2 grid steps (megacore) and per-step VMEM small."""
    def blk_bytes(tb):
        # adj + fused-input blocks (compute dtype) + lane-dense f32 output block.
        return tb * (N * N + N * fin_pad) * in_itemsize + tb * N * N * 4

    best = 1
    for cand in range(1, T + 1):
        if T % cand != 0:
            continue
        if T > 1 and T // cand < 2:
            continue
        if blk_bytes(cand) > budget_bytes:
            continue
        best = max(best, cand)
    return best


def _gode_kernel(adj_ref, x_ref, wenc_ref, benc_ref, wode_ref, bode_ref, out_ref):
    tb, n, _ = adj_ref.shape
    fin = x_ref.shape[-1]
    d = wenc_ref.shape[-1]

    # Hoist parameter loads once (JAX does not CSE re-broadcasts in the unrolled loop).
    w_enc = wenc_ref[...]          # [fin, d]   (compute dtype)
    b_enc = benc_ref[...]          # [1, d]     f32
    w_ode = wode_ref[...]          # [d, d]     (compute dtype)
    b_ode = bode_ref[...]          # [1, d]     f32
    cdtype = w_ode.dtype

    # ---- Encoding: one fused projection over all tb*n nodes, then per-timestep A @ x ----
    x_flat = x_ref[...].reshape(tb * n, fin)
    proj = jnp.dot(x_flat, w_enc, preferred_element_type=jnp.float32) + b_enc   # [tb*n, d] f32
    proj3 = proj.reshape(tb, n, d).astype(cdtype)
    h = jnp.einsum("tnm,tmd->tnd", adj_ref[...], proj3,
                   preferred_element_type=jnp.float32)                          # [tb, n, d] f32
    h = jnp.maximum(h, 0.0)

    # ---- ODE block: fixed-step Euler of dz/dt = tanh(z W + b); timesteps flattened ----
    dt = jnp.float32(1.0 / ODE_STEPS)
    z = h.reshape(tb * n, d)                                                    # f32 state
    for _ in range(ODE_STEPS):                                                  # unrolled
        dz = jnp.tanh(jnp.dot(z.astype(cdtype), w_ode,
                              preferred_element_type=jnp.float32) + b_ode)
        z = z + dt * dz

    # ---- Decoding: sigmoid(z z^T) per timestep; contract on d (no explicit transpose) ----
    z3 = z.reshape(tb, n, d).astype(cdtype)
    logits = lax.dot_general(z3, z3,
                             dimension_numbers=(((2,), (2,)), ((0,), (0,))),
                             preferred_element_type=jnp.float32)                # [tb, n, n]
    # Lane-dense store: write a [tb, n*n] slab (reshaped back to [T, N, N] in the wrapper).
    out_ref[0] = jax.nn.sigmoid(logits).reshape(tb, n * n)


def gode_forward(adj, feat, gdv, pr, params, *, tb=None, compute_dtype=None):
    """Runs the fused GODE forward pass. Returns [T, N, N] decoded adjacencies."""
    T, N, _ = adj.shape
    D = params["w_feat"].shape[-1]

    if compute_dtype is None:
        compute_dtype = _default_compute_dtype()

    # Fuse the three encoder projections: [feat|gdv|pr] @ [Wf;Wg;Wp]  (exactly equivalent).
    x = jnp.concatenate([feat, gdv, pr], axis=-1)                               # [T, N, F+G+1]
    w_enc = jnp.concatenate(
        [params["w_feat"], params["w_gdv"], params["w_pr"]], axis=0)            # [F+G+1, D]

    # Zero-pad dims for clean MXU / lane occupancy (numerically exact).
    fin = x.shape[-1]
    fin_pad = _round_up(fin, 8)
    d_pad = _round_up(D, 128)
    x = jnp.pad(x, ((0, 0), (0, 0), (0, fin_pad - fin)))
    w_enc = jnp.pad(w_enc, ((0, fin_pad - fin), (0, d_pad - D)))
    b_enc = jnp.pad(params["b_enc"], ((0, 0), (0, d_pad - D)))
    w_ode = jnp.pad(params["w_ode"], ((0, d_pad - D), (0, d_pad - D)))
    b_ode = jnp.pad(params["b_ode"], ((0, 0), (0, d_pad - D)))

    # MXU operands in compute dtype (f32 accumulation in-kernel); biases / output stay f32.
    adj_c = adj.astype(compute_dtype)
    x = x.astype(compute_dtype)
    w_enc = w_enc.astype(compute_dtype)
    w_ode = w_ode.astype(compute_dtype)

    if tb is None:
        tb = _pick_tb(T, N, fin_pad, jnp.dtype(compute_dtype).itemsize)
    assert T % tb == 0, (T, tb)
    g = T // tb

    grid_spec = pltpu.PrefetchScalarGridSpec(
        num_scalar_prefetch=0,
        grid=(g,),
        in_specs=[
            pl.BlockSpec((tb, N, N), lambda t: (t, 0, 0)),        # adj
            pl.BlockSpec((tb, N, fin_pad), lambda t: (t, 0, 0)),  # fused [feat|gdv|pr]
            pl.BlockSpec((fin_pad, d_pad), lambda t: (0, 0)),     # W_enc (fused)
            pl.BlockSpec((1, d_pad), lambda t: (0, 0)),           # b_enc
            pl.BlockSpec((d_pad, d_pad), lambda t: (0, 0)),       # W_ode
            pl.BlockSpec((1, d_pad), lambda t: (0, 0)),           # b_ode
        ],
        # Lane-dense output slab: last dim N*N, leading (grid) dim blocked by 1.
        out_specs=pl.BlockSpec((1, tb, N * N), lambda t: (t, 0, 0)),
    )

    out = pl.pallas_call(
        _gode_kernel,
        out_shape=jax.ShapeDtypeStruct((g, tb, N * N), jnp.float32),
        grid_spec=grid_spec,
        compiler_params=pltpu.CompilerParams(
            dimension_semantics=("parallel",)),   # timestep batches are independent
    )(adj_c, x, w_enc, b_enc, w_ode, b_ode)

    return out.reshape(T, N, N)


def init_params(key, num_feat, num_gdv, enc_dim):
    """Deterministic (Xavier-ish) parameter init matching the module's shapes."""
    ks = jax.random.split(key, 5)

    def xavier(k, shape):
        fan_in, fan_out = shape[0], shape[-1]
        scale = jnp.sqrt(2.0 / (fan_in + fan_out))
        return scale * jax.random.normal(k, shape, dtype=jnp.float32)

    return {
        "w_feat": xavier(ks[0], (num_feat, enc_dim)),
        "w_gdv":  xavier(ks[1], (num_gdv, enc_dim)),
        "w_pr":   xavier(ks[2], (1, enc_dim)),
        "b_enc":  jnp.zeros((1, enc_dim), jnp.float32),
        "w_ode":  xavier(ks[3], (enc_dim, enc_dim)),
        "b_ode":  jnp.zeros((1, enc_dim), jnp.float32),
    }


if __name__ == "__main__":
    # Small, deterministic example shapes consistent with the module:
    #   time_length = 9, tasktype != 'multisteps' -> num_time_steps = 8
    #   N = 16 nodes, num_feat = 8, num_gdv = 16, num_pr = 1, encoding_layer_config = 32
    T, N, NUM_FEAT, NUM_GDV, ENC_DIM = 8, 16, 8, 16, 32

    key = jax.random.PRNGKey(0)
    k_adj, k_feat, k_gdv, k_pr, k_param = jax.random.split(key, 5)

    # Symmetric {0,1} adjacency with self-loops per timestep.
    raw = jax.random.uniform(k_adj, (T, N, N))
    adj = (raw + jnp.swapaxes(raw, 1, 2) > 1.0).astype(jnp.float32)
    adj = jnp.minimum(adj + jnp.eye(N, dtype=jnp.float32)[None], 1.0)

    feat = jax.random.normal(k_feat, (T, N, NUM_FEAT), dtype=jnp.float32)
    gdv = jax.random.normal(k_gdv, (T, N, NUM_GDV), dtype=jnp.float32)
    pr = jax.random.uniform(k_pr, (T, N, 1), dtype=jnp.float32)

    params = init_params(k_param, NUM_FEAT, NUM_GDV, ENC_DIM)

    out = jax.block_until_ready(gode_forward(adj, feat, gdv, pr, params))

    assert out.shape == (T, N, N), out.shape
    assert bool(jnp.all(jnp.isfinite(out)))
    print("KERNEL_OK")
</pallas_src>

<mosaic_0001>
module attributes {stable_mosaic.version = 11 : i64} {
  func.func @_gode_kernel(%arg0: i32, %arg1: memref<4x16x16xf32, #tpu.memory_space<vmem>>, %arg2: memref<4x16x32xf32, #tpu.memory_space<vmem>>, %arg3: memref<32x128xf32, #tpu.memory_space<vmem>>, %arg4: memref<1x128xf32, #tpu.memory_space<vmem>>, %arg5: memref<128x128xf32, #tpu.memory_space<vmem>>, %arg6: memref<1x128xf32, #tpu.memory_space<vmem>>, %arg7: memref<1x4x256xf32, #tpu.memory_space<vmem>>) attributes {dimension_semantics = [#tpu.dimension_semantics<parallel>], iteration_bounds = array<i64: 2>, scalar_prefetch = 0 : i64, scratch_operands = 0 : i64, tpu.core_type = #tpu.core_type<tc>, window_params = [{transform_indices = @transform_0, window_bounds = array<i64: 4, 16, 16>}, {transform_indices = @transform_1, window_bounds = array<i64: 4, 16, 32>}, {pipeline_mode = #tpu.pipeline_mode<synchronous>, transform_indices = @transform_2, window_bounds = array<i64: 32, 128>}, {pipeline_mode = #tpu.pipeline_mode<synchronous>, transform_indices = @transform_3, window_bounds = array<i64: 1, 128>}, {pipeline_mode = #tpu.pipeline_mode<synchronous>, transform_indices = @transform_4, window_bounds = array<i64: 128, 128>}, {pipeline_mode = #tpu.pipeline_mode<synchronous>, transform_indices = @transform_5, window_bounds = array<i64: 1, 128>}, {transform_indices = @transform_6, window_bounds = array<i64: 1, 4, 256>}]} {
    %c0 = arith.constant 0 : index
    %c0_0 = arith.constant 0 : index
    %0 = vector.load %arg3[%c0, %c0_0] : memref<32x128xf32, #tpu.memory_space<vmem>>, vector<32x128xf32>
    %c0_1 = arith.constant 0 : index
    %c0_2 = arith.constant 0 : index
    %1 = vector.load %arg4[%c0_1, %c0_2] : memref<1x128xf32, #tpu.memory_space<vmem>>, vector<1x128xf32>
    %c0_3 = arith.constant 0 : index
    %c0_4 = arith.constant 0 : index
    %2 = vector.load %arg5[%c0_3, %c0_4] : memref<128x128xf32, #tpu.memory_space<vmem>>, vector<128x128xf32>
    %c0_5 = arith.constant 0 : index
    %c0_6 = arith.constant 0 : index
    %3 = vector.load %arg6[%c0_5, %c0_6] : memref<1x128xf32, #tpu.memory_space<vmem>>, vector<1x128xf32>
    %c0_7 = arith.constant 0 : index
    %c0_8 = arith.constant 0 : index
    %c0_9 = arith.constant 0 : index
    %4 = vector.load %arg2[%c0_7, %c0_8, %c0_9] : memref<4x16x32xf32, #tpu.memory_space<vmem>>, vector<4x16x32xf32>
    %5 = vector.shape_cast %4 : vector<4x16x32xf32> to vector<64x32xf32>
    %cst = arith.constant dense<0.000000e+00> : vector<64x128xf32>
    %6 = tpu.matmul %5, %0, %cst {dimension_numbers = #tpu.dot_dimension_numbers<[1], [0], [0], [1], [0, 0, 1, 1], [], []>} : vector<64x32xf32>, vector<32x128xf32>, vector<64x128xf32> -> vector<64x128xf32>
    %7 = vector.broadcast %1 : vector<1x128xf32> to vector<64x128xf32>
    %8 = arith.addf %6, %7 : vector<64x128xf32>
    %9 = vector.shape_cast %8 : vector<64x128xf32> to vector<4x16x128xf32>
    %c0_10 = arith.constant 0 : index
    %c0_11 = arith.constant 0 : index
    %c0_12 = arith.constant 0 : index
    %10 = vector.load %arg1[%c0_10, %c0_11, %c0_12] : memref<4x16x16xf32, #tpu.memory_space<vmem>>, vector<4x16x16xf32>
    "tpu.trace_start"() <{level = 10 : i32, message = "tnm,tmd->tnd"}> : () -> ()
    %cst_13 = arith.constant dense<0.000000e+00> : vector<4x16x128xf32>
    %11 = tpu.matmul %10, %9, %cst_13 {dimension_numbers = #tpu.dot_dimension_numbers<[2], [1], [1], [2], [0, 0, 0, 1, 1, 2], [0], [0]>} : vector<4x16x16xf32>, vector<4x16x128xf32>, vector<4x16x128xf32> -> vector<4x16x128xf32>
    "tpu.trace_stop"() : () -> ()
    %cst_14 = arith.constant 0.000000e+00 : f32
    %12 = vector.broadcast %cst_14 : f32 to vector<4x16x128xf32>
    %13 = arith.maximumf %11, %12 : vector<4x16x128xf32>
    %14 = vector.shape_cast %13 : vector<4x16x128xf32> to vector<64x128xf32>
    %cst_15 = arith.constant dense<0.000000e+00> : vector<64x128xf32>
    %15 = tpu.matmul %14, %2, %cst_15 {dimension_numbers = #tpu.dot_dimension_numbers<[1], [0], [0], [1], [0, 0, 1, 1], [], []>} : vector<64x128xf32>, vector<128x128xf32>, vector<64x128xf32> -> vector<64x128xf32>
    %16 = vector.broadcast %3 : vector<1x128xf32> to vector<64x128xf32>
    %17 = arith.addf %15, %16 : vector<64x128xf32>
    %18 = math.tanh %17 : vector<64x128xf32>
    %cst_16 = arith.constant 2.500000e-01 : f32
    %19 = vector.broadcast %cst_16 : f32 to vector<64x128xf32>
    %20 = arith.mulf %19, %18 : vector<64x128xf32>
    %21 = arith.addf %14, %20 : vector<64x128xf32>
    %cst_17 = arith.constant dense<0.000000e+00> : vector<64x128xf32>
    %22 = tpu.matmul %21, %2, %cst_17 {dimension_numbers = #tpu.dot_dimension_numbers<[1], [0], [0], [1], [0, 0, 1, 1], [], []>} : vector<64x128xf32>, vector<128x128xf32>, vector<64x128xf32> -> vector<64x128xf32>
    %23 = vector.broadcast %3 : vector<1x128xf32> to vector<64x128xf32>
    %24 = arith.addf %22, %23 : vector<64x128xf32>
    %25 = math.tanh %24 : vector<64x128xf32>
    %cst_18 = arith.constant 2.500000e-01 : f32
    %26 = vector.broadcast %cst_18 : f32 to vector<64x128xf32>
    %27 = arith.mulf %26, %25 : vector<64x128xf32>
    %28 = arith.addf %21, %27 : vector<64x128xf32>
    %cst_19 = arith.constant dense<0.000000e+00> : vector<64x128xf32>
    %29 = tpu.matmul %28, %2, %cst_19 {dimension_numbers = #tpu.dot_dimension_numbers<[1], [0], [0], [1], [0, 0, 1, 1], [], []>} : vector<64x128xf32>, vector<128x128xf32>, vector<64x128xf32> -> vector<64x128xf32>
    %30 = vector.broadcast %3 : vector<1x128xf32> to vector<64x128xf32>
    %31 = arith.addf %29, %30 : vector<64x128xf32>
    %32 = math.tanh %31 : vector<64x128xf32>
    %cst_20 = arith.constant 2.500000e-01 : f32
    %33 = vector.broadcast %cst_20 : f32 to vector<64x128xf32>
    %34 = arith.mulf %33, %32 : vector<64x128xf32>
    %35 = arith.addf %28, %34 : vector<64x128xf32>
    %cst_21 = arith.constant dense<0.000000e+00> : vector<64x128xf32>
    %36 = tpu.matmul %35, %2, %cst_21 {dimension_numbers = #tpu.dot_dimension_numbers<[1], [0], [0], [1], [0, 0, 1, 1], [], []>} : vector<64x128xf32>, vector<128x128xf32>, vector<64x128xf32> -> vector<64x128xf32>
    %37 = vector.broadcast %3 : vector<1x128xf32> to vector<64x128xf32>
    %38 = arith.addf %36, %37 : vector<64x128xf32>
    %39 = math.tanh %38 : vector<64x128xf32>
    %cst_22 = arith.constant 2.500000e-01 : f32
    %40 = vector.broadcast %cst_22 : f32 to vector<64x128xf32>
    %41 = arith.mulf %40, %39 : vector<64x128xf32>
    %42 = arith.addf %35, %41 : vector<64x128xf32>
    %43 = vector.shape_cast %42 : vector<64x128xf32> to vector<4x16x128xf32>
    %cst_23 = arith.constant dense<0.000000e+00> : vector<4x16x16xf32>
    %44 = tpu.matmul %43, %43, %cst_23 {dimension_numbers = #tpu.dot_dimension_numbers<[2], [2], [1], [1], [0, 0, 0, 1, 1, 1], [0], [0]>} : vector<4x16x128xf32>, vector<4x16x128xf32>, vector<4x16x16xf32> -> vector<4x16x16xf32>
    %45 = arith.negf %44 : vector<4x16x16xf32>
    %46 = math.exp %45 : vector<4x16x16xf32>
    %cst_24 = arith.constant 1.000000e+00 : f32
    %47 = vector.broadcast %cst_24 : f32 to vector<4x16x16xf32>
    %48 = arith.addf %47, %46 : vector<4x16x16xf32>
    %49 = arith.divf %47, %48 : vector<4x16x16xf32>
    %50 = vector.shape_cast %49 : vector<4x16x16xf32> to vector<4x256xf32>
    %c0_25 = arith.constant 0 : index
    %c0_26 = arith.constant 0 : index
    %c0_27 = arith.constant 0 : index
    %51 = vector.load %arg7[%c0_25, %c0_26, %c0_27] : memref<1x4x256xf32, #tpu.memory_space<vmem>>, vector<1x4x256xf32>
    %52 = vector.shape_cast %51 : vector<1x4x256xf32> to vector<4x256xf32>
    %53 = vector.shape_cast %50 : vector<4x256xf32> to vector<1x4x256xf32>
    tpu.vector_store %arg7[%c0_25, %c0_26, %c0_27], %53 {strides = array<i32>} : memref<1x4x256xf32, #tpu.memory_space<vmem>>, vector<1x4x256xf32>,
    return
  }
  func.func @transform_0(%arg0: i32) -> (i32, i32, i32) {
    %c0_i32 = arith.constant 0 : i32
    %c0_i32_0 = arith.constant 0 : i32
    %c0_i32_1 = arith.constant 0 : i32
    return %arg0, %c0_i32, %c0_i32_0 : i32, i32, i32
  }
  func.func @transform_1(%arg0: i32) -> (i32, i32, i32) {
    %c0_i32 = arith.constant 0 : i32
    %c0_i32_0 = arith.constant 0 : i32
    %c0_i32_1 = arith.constant 0 : i32
    return %arg0, %c0_i32, %c0_i32_0 : i32, i32, i32
  }
  func.func @transform_2(%arg0: i32) -> (i32, i32) {
    %c0_i32 = arith.constant 0 : i32
    %c0_i32_0 = arith.constant 0 : i32
    %c0_i32_1 = arith.constant 0 : i32
    return %c0_i32, %c0_i32_0 : i32, i32
  }
  func.func @transform_3(%arg0: i32) -> (i32, i32) {
    %c0_i32 = arith.constant 0 : i32
    %c0_i32_0 = arith.constant 0 : i32
    %c0_i32_1 = arith.constant 0 : i32
    return %c0_i32, %c0_i32_0 : i32, i32
  }
  func.func @transform_4(%arg0: i32) -> (i32, i32) {
    %c0_i32 = arith.constant 0 : i32
    %c0_i32_0 = arith.constant 0 : i32
    %c0_i32_1 = arith.constant 0 : i32
    return %c0_i32, %c0_i32_0 : i32, i32
  }
  func.func @transform_5(%arg0: i32) -> (i32, i32) {
    %c0_i32 = arith.constant 0 : i32
    %c0_i32_0 = arith.constant 0 : i32
    %c0_i32_1 = arith.constant 0 : i32
    return %c0_i32, %c0_i32_0 : i32, i32
  }
  func.func @transform_6(%arg0: i32) -> (i32, i32, i32) {
    %c0_i32 = arith.constant 0 : i32
    %c0_i32_0 = arith.constant 0 : i32
    %c0_i32_1 = arith.constant 0 : i32
    return %arg0, %c0_i32, %c0_i32_0 : i32, i32, i32
  }
}

</mosaic_0001>

<llo_original>
// kernel: tpu_custom_call.1
$region0: #{tpu_custom_call.1}
  #allocation0 [shape = 'u32[]', space=smem, size = 0x4, offset = 0x4, fixed_abs, tag = 'smem constant byte address 0x4 - core index']
  #allocation1 [shape = 'u32[144,128]{1,0:T(1,128)}', space=vmem, size = 0x12000, scoped, tag = 'internal scratch']
  %s0 = inlined_call_operand.hbm [shape: f32[8,16,16], index: 0, kind: input, shape index: {}]
  %s1 = inlined_call_operand.hbm [shape: f32[8,16,32], index: 1, kind: input, shape index: {}]
  %s2 = inlined_call_operand.hbm [shape: f32[32,128], index: 2, kind: input, shape index: {}]
  %s3 = inlined_call_operand.vmem [shape: f32[1,128], index: 3, kind: input, shape index: {}]
  %s4 = inlined_call_operand.hbm [shape: f32[128,128], index: 4, kind: input, shape index: {}]
  %s5 = inlined_call_operand.vmem [shape: f32[1,128], index: 5, kind: input, shape index: {}]
  %s6 = inlined_call_operand.hbm [shape: f32[2,4,256], index: 6, kind: output, shape index: {}]
  %s7 = sld [smem:[#allocation0]]
  $region73: #{tpu_custom_call.1} parent=0
    _
  %s9 = ssub.s32 1, %s7
  %s10 = scalar_select 0, %s9, %s7
  $region1: #{tpu_custom_call.1} parent=0
    #allocation2 [shape = 'u8[65536]{0}', space=vmem, size = 0x10000, scoped, tag = 'input window, operand 0']
    #allocation3 [shape = 's32[2]{0}', space=sflag, size = 0x8, scoped, tag = 'scoped memory for tpu_custom_call.1']
    #allocation4 [shape = 's32[2]{0}', space=sflag, size = 0x8, scoped, tag = 'scoped memory for tpu_custom_call.1']
    #allocation5 [shape = 'u8[65536]{0}', space=vmem, size = 0x10000, scoped, tag = 'input window, operand 1']
    #allocation6 [shape = 's32[2]{0}', space=sflag, size = 0x8, scoped, tag = 'scoped memory for tpu_custom_call.1']
    #allocation7 [shape = 'u8[16384]{0}', space=vmem, size = 0x4000, scoped, tag = 'input window, operand 2, single buffered']
    #allocation8 [shape = 'u8[65536]{0}', space=vmem, size = 0x10000, scoped, tag = 'input window, operand 4, single buffered']
    #allocation9 [shape = 's32[1]{0}', space=sflag, size = 0x4, scoped, tag = 'scoped memory for tpu_custom_call.1']
    #allocation10 [shape = 'u8[8192]{0}', space=vmem, size = 0x2000, scoped, tag = 'output window, operand 0']
    %11 = vsyncpa [#allocation3], 0
    %s12 = scalar_lea.sflag [#allocation3], 1
    %13 = vsyncpa %s12, 0
    %14 = vsyncpa [#allocation6], 0
    %s15 = scalar_lea.sflag [#allocation6], 1
    %16 = vsyncpa %s15, 0
    %17 = vsyncpa [#allocation9], 0
    %18 = vsyncpa [#allocation4], 0
    %s19 = scalar_lea.sflag [#allocation4], 1
    %20 = vsyncpa %s19, 0
    loop: start=0, step=1, limit=4
    $region2: #{tpu_custom_call.1} parent=1 // loop_pre_header
      _
    $region3: #{tpu_custom_call.1} parent=1 // loop_header
      %s22 = sphi 0, %s26
      %p23 = scmp.ge.s32.totalorder %s22, 4
      %s32 = sphi 0, %s34
      %s35 = sphi 0, %s32
      %s36 = sphi 0, %s35
      %s52 = sphi 0, %s36
      %s58 = sphi 0, %s60
      %s61 = sphi 0, %s58
      %s62 = sphi 0, %s61
      %s78 = sphi 0, %s62
      %s82 = sphi 0, %s82
      %s84 = sphi 0, %s82
      %s85 = sphi 0, %s84
      %s99 = sphi 0, %s85
      %s103 = sphi 0, %s103
      %s105 = sphi 0, %s103
      %s106 = sphi 0, %s105
      %s120 = sphi 0, %s106
      %s124 = sphi 0, %s124
      %s126 = sphi 0, %s124
      %s127 = sphi 0, %s126
      %s141 = sphi 0, %s127
      %s145 = sphi 0, %s145
      %s147 = sphi 0, %s145
      %s148 = sphi 0, %s147
      %s162 = sphi 0, %s148
      %s168 = sphi 0, %s170
      %s171 = sphi 0, %s168
      %s172 = sphi 0, %s171
      %s188 = sphi 0, %s172
    $region4: #{tpu_custom_call.1} parent=1 // loop_header_branch
      %25 = sbr.rel (%p23) target = $region8
    $region5: #{tpu_custom_call.1} parent=1 // loop_body
      %s27 = ssub.s32 %s22, 1
      %s28 = ssub.s32 %s22, 2
      %s29 = sadd.s32 %s22, 1
      %s30 = ssub.s32 %s22, %s29
      %p31 = scmp.eq.s32.totalorder %s30, 0
      %s33 = sadd.s32 %s32, 1
      %s34 = scalar_select %p31, %s32, %s33
      %p37 = pneg %p31
      %p38 = scmp.eq.s32.totalorder %s22, 1
      %p39 = por %p37, %p38
      %p40 = scmp.ne.s32.totalorder %s32, %s35
      %p41 = scmp.eq.s32.totalorder %s22, 0
      %p42 = por %p40, %p41
      %p43 = scmp.ne.s32.totalorder %s32, %s35
      %p44 = scmp.eq.s32.totalorder %s27, 1
      %p45 = por %p43, %p44
      %p46 = scmp.ne.s32.totalorder %s35, %s36
      %p47 = scmp.eq.s32.totalorder %s27, 0
      %p48 = por %p46, %p47
      %p49 = scmp.ne.s32.totalorder %s35, %s36
      %p50 = scmp.eq.s32.totalorder %s28, 1
      %p51 = por %p49, %p50
      %p53 = scmp.ne.s32.totalorder %s36, %s52
      %p54 = scmp.eq.s32.totalorder %s28, 0
      %p55 = por %p53, %p54
      %s56 = ssub.s32 %s22, %s29
      %p57 = scmp.eq.s32.totalorder %s56, 0
      %s59 = sadd.s32 %s58, 1
      %s60 = scalar_select %p57, %s58, %s59
      %p63 = pneg %p57
      %p64 = scmp.eq.s32.totalorder %s22, 1
      %p65 = por %p63, %p64
      %p66 = scmp.ne.s32.totalorder %s58, %s61
      %p67 = scmp.eq.s32.totalorder %s22, 0
      %p68 = por %p66, %p67
      %p69 = scmp.ne.s32.totalorder %s58, %s61
      %p70 = scmp.eq.s32.totalorder %s27, 1
      %p71 = por %p69, %p70
      %p72 = scmp.ne.s32.totalorder %s61, %s62
      %p73 = scmp.eq.s32.totalorder %s27, 0
      %p74 = por %p72, %p73
      %p75 = scmp.ne.s32.totalorder %s61, %s62
      %p76 = scmp.eq.s32.totalorder %s28, 1
      %p77 = por %p75, %p76
      %p79 = scmp.ne.s32.totalorder %s62, %s78
      %p80 = scmp.eq.s32.totalorder %s28, 0
      %p81 = por %p79, %p80
      %s83 = sadd.s32 %s82, 1
      %p86 = scmp.eq.s32.totalorder %s22, 1
      %p87 = scmp.ne.s32.totalorder %s82, %s84
      %p88 = scmp.eq.s32.totalorder %s22, 0
      %p89 = por %p87, %p88
      %p90 = scmp.ne.s32.totalorder %s82, %s84
      %p91 = scmp.eq.s32.totalorder %s27, 1
      %p92 = por %p90, %p91
      %p93 = scmp.ne.s32.totalorder %s84, %s85
      %p94 = scmp.eq.s32.totalorder %s27, 0
      %p95 = por %p93, %p94
      %p96 = scmp.ne.s32.totalorder %s84, %s85
      %p97 = scmp.eq.s32.totalorder %s28, 1
      %p98 = por %p96, %p97
      %p100 = scmp.ne.s32.totalorder %s85, %s99
      %p101 = scmp.eq.s32.totalorder %s28, 0
      %p102 = por %p100, %p101
      %s104 = sadd.s32 %s103, 1
      %p107 = scmp.eq.s32.totalorder %s22, 1
      %p108 = scmp.ne.s32.totalorder %s103, %s105
      %p109 = scmp.eq.s32.totalorder %s22, 0
      %p110 = por %p108, %p109
      %p111 = scmp.ne.s32.totalorder %s103, %s105
      %p112 = scmp.eq.s32.totalorder %s27, 1
      %p113 = por %p111, %p112
      %p114 = scmp.ne.s32.totalorder %s105, %s106
      %p115 = scmp.eq.s32.totalorder %s27, 0
      %p116 = por %p114, %p115
      %p117 = scmp.ne.s32.totalorder %s105, %s106
      %p118 = scmp.eq.s32.totalorder %s28, 1
      %p119 = por %p117, %p118
      %p121 = scmp.ne.s32.totalorder %s106, %s120
      %p122 = scmp.eq.s32.totalorder %s28, 0
      %p123 = por %p121, %p122
      %s125 = sadd.s32 %s124, 1
      %p128 = scmp.eq.s32.totalorder %s22, 1
      %p129 = scmp.ne.s32.totalorder %s124, %s126
      %p130 = scmp.eq.s32.totalorder %s22, 0
      %p131 = por %p129, %p130
      %p132 = scmp.ne.s32.totalorder %s124, %s126
      %p133 = scmp.eq.s32.totalorder %s27, 1
      %p134 = por %p132, %p133
      %p135 = scmp.ne.s32.totalorder %s126, %s127
      %p136 = scmp.eq.s32.totalorder %s27, 0
      %p137 = por %p135, %p136
      %p138 = scmp.ne.s32.totalorder %s126, %s127
      %p139 = scmp.eq.s32.totalorder %s28, 1
      %p140 = por %p138, %p139
      %p142 = scmp.ne.s32.totalorder %s127, %s141
      %p143 = scmp.eq.s32.totalorder %s28, 0
      %p144 = por %p142, %p143
      %s146 = sadd.s32 %s145, 1
      %p149 = scmp.eq.s32.totalorder %s22, 1
      %p150 = scmp.ne.s32.totalorder %s145, %s147
      %p151 = scmp.eq.s32.totalorder %s22, 0
      %p152 = por %p150, %p151
      %p153 = scmp.ne.s32.totalorder %s145, %s147
      %p154 = scmp.eq.s32.totalorder %s27, 1
      %p155 = por %p153, %p154
      %p156 = scmp.ne.s32.totalorder %s147, %s148
      %p157 = scmp.eq.s32.totalorder %s27, 0
      %p158 = por %p156, %p157
      %p159 = scmp.ne.s32.totalorder %s147, %s148
      %p160 = scmp.eq.s32.totalorder %s28, 1
      %p161 = por %p159, %p160
      %p163 = scmp.ne.s32.totalorder %s148, %s162
      %p164 = scmp.eq.s32.totalorder %s28, 0
      %p165 = por %p163, %p164
      %s166 = ssub.s32 %s22, %s29
      %p167 = scmp.eq.s32.totalorder %s166, 0
      %s169 = sadd.s32 %s168, 1
      %s170 = scalar_select %p167, %s168, %s169
      %p173 = pneg %p167
      %p174 = scmp.eq.s32.totalorder %s22, 1
      %p175 = por %p173, %p174
      %p176 = scmp.ne.s32.totalorder %s168, %s171
      %p177 = scmp.eq.s32.totalorder %s22, 0
      %p178 = por %p176, %p177
      %p179 = scmp.ne.s32.totalorder %s168, %s171
      %p180 = scmp.eq.s32.totalorder %s27, 1
      %p181 = por %p179, %p180
      %p182 = scmp.ne.s32.totalorder %s171, %s172
      %p183 = scmp.eq.s32.totalorder %s27, 0
      %p184 = por %p182, %p183
      %p185 = scmp.ne.s32.totalorder %s171, %s172
      %p186 = scmp.eq.s32.totalorder %s28, 1
      %p187 = por %p185, %p186
      %p189 = scmp.ne.s32.totalorder %s172, %s188
      %p190 = scmp.eq.s32.totalorder %s28, 0
      %p191 = por %p189, %p190
      %p192 = scmp.le.s32.totalorder 1, %s22
      %p193 = scmp.lt.s32.totalorder %s22, 3
      %p194 = pnand %p192, %p193
      %p195 = pneg %p194
      // Predicated region
      $region9: #{tpu_custom_call.1} parent=5 // pred_check
        _
      $region10: #{tpu_custom_call.1} parent=5 // pred_check_branch
        %197 = sbr.rel (%p194) target = $region12
      $region11: #{tpu_custom_call.1} parent=5 // pred_region
        %s198 = ssub.s32 %s22, 1
        // Predicated region
        $region13: #{tpu_custom_call.1} parent=11 // pred_check
          %p199 = pneg %p95
        $region14: #{tpu_custom_call.1} parent=11 // pred_check_branch
          %201 = sbr.rel (%p199) target = $region16
        $region15: #{tpu_custom_call.1} parent=11 // pred_region
          %s203 = ssub.s32 512, 512
          %204 = vsyncadd [#allocation6], %s203
          %s205 = sshll.u32 [#allocation7], 4
          %s206 = int_to_ptr.vmem [resolvable:$true] %s205
          %211 = dma.hbm_to_vmem [thread:$0]  %s2, 512, %s206, [#allocation6], 128, 128, 8
        $region16: #{tpu_custom_call.1} parent=11 // pred_fallthru
          _
        // Predicated region
        $region17: #{tpu_custom_call.1} parent=11 // pred_check
          %p212 = pneg %p116
        $region18: #{tpu_custom_call.1} parent=11 // pred_check_branch
          %214 = sbr.rel (%p212) target = $region20
        $region19: #{tpu_custom_call.1} parent=11 // pred_region
          _
        $region20: #{tpu_custom_call.1} parent=11 // pred_fallthru
          _
        // Predicated region
        $region21: #{tpu_custom_call.1} parent=11 // pred_check
          %p215 = pneg %p137
        $region22: #{tpu_custom_call.1} parent=11 // pred_check_branch
          %217 = sbr.rel (%p215) target = $region24
        $region23: #{tpu_custom_call.1} parent=11 // pred_region
          %s219 = ssub.s32 2048, 2048
          %220 = vsyncadd [#allocation9], %s219
          %s221 = sshll.u32 [#allocation8], 4
          %s222 = int_to_ptr.vmem [resolvable:$true] %s221
          %227 = dma.hbm_to_vmem [thread:$0]  %s4, 2048, %s222, [#allocation9], 128, 128, 8
        $region24: #{tpu_custom_call.1} parent=11 // pred_fallthru
          _
        // Predicated region
        $region25: #{tpu_custom_call.1} parent=11 // pred_check
          %p228 = pneg %p158
        $region26: #{tpu_custom_call.1} parent=11 // pred_check_branch
          %230 = sbr.rel (%p228) target = $region28
        $region27: #{tpu_custom_call.1} parent=11 // pred_region
          _
        $region28: #{tpu_custom_call.1} parent=11 // pred_fallthru
          _
      $region12: #{tpu_custom_call.1} parent=5 // pred_fallthru
        _
      %p231 = scmp.lt.s32.totalorder %s22, 2
      // Predicated region
      $region29: #{tpu_custom_call.1} parent=5 // pred_check
        %p232 = pneg %p231
      $region30: #{tpu_custom_call.1} parent=5 // pred_check_branch
        %234 = sbr.rel (%p232) target = $region32
      $region31: #{tpu_custom_call.1} parent=5 // pred_region
        // Predicated region
        $region33: #{tpu_custom_call.1} parent=31 // pred_check
          %p235 = pneg %p42
        $region34: #{tpu_custom_call.1} parent=31 // pred_check_branch
          %237 = sbr.rel (%p235) target = $region36
        $region35: #{tpu_custom_call.1} parent=31 // pred_region
          %s238 = sand.u32 %s32, 1
          %s239 = scalar_lea.sflag [#allocation3], %s238
          %s240 = sand.u32 %s32, 1
          %s241 = smul.addr %s240, 64
          %s242 = scalar_lea.vmem [#allocation2], %s241
          %s243 = smul.u32 4, %s22
          %s245 = ssub.s32 1024, 1024
          %246 = vsyncadd %s239, %s245
          %s247 = smul.addr %s243, 2
          %s248 = smul.addr %s247, 128
          %s249 = scalar_lea.hbm %s0, %s248
          %s250 = sshll.u32 %s242, 4
          %s251 = int_to_ptr.vmem [resolvable:$true] %s250
          %256 = dma.hbm_to_vmem [thread:$0]  %s249, 1024, %s251, %s239, 128, 128, 8
        $region36: #{tpu_custom_call.1} parent=31 // pred_fallthru
          _
        // Predicated region
        $region37: #{tpu_custom_call.1} parent=31 // pred_check
          %p257 = pneg %p68
        $region38: #{tpu_custom_call.1} parent=31 // pred_check_branch
          %259 = sbr.rel (%p257) target = $region40
        $region39: #{tpu_custom_call.1} parent=31 // pred_region
          %s260 = sand.u32 %s22, 1
          %s261 = scalar_lea.sflag [#allocation6], %s260
          %s262 = sand.u32 %s58, 1
          %s263 = smul.addr %s262, 64
          %s264 = scalar_lea.vmem [#allocation5], %s263
          %s265 = smul.u32 4, %s22
          %s267 = ssub.s32 1024, 1024
          %268 = vsyncadd %s261, %s267
          %s269 = smul.addr %s265, 2
          %s270 = smul.addr %s269, 128
          %s271 = scalar_lea.hbm %s1, %s270
          %s272 = sshll.u32 %s264, 4
          %s273 = int_to_ptr.vmem [resolvable:$true] %s272
          %278 = dma.hbm_to_vmem [thread:$0]  %s271, 1024, %s273, %s261, 128, 128, 8
        $region40: #{tpu_custom_call.1} parent=31 // pred_fallthru
          _
      $region32: #{tpu_custom_call.1} parent=5 // pred_fallthru
        _
      %p279 = scmp.le.s32.totalorder 1, %s22
      %p280 = scmp.lt.s32.totalorder %s22, 3
      %p281 = pnand %p279, %p280
      %p282 = pneg %p281
      // Predicated region
      $region41: #{tpu_custom_call.1} parent=5 // pred_check
        _
      $region42: #{tpu_custom_call.1} parent=5 // pred_check_branch
        %284 = sbr.rel (%p281) target = $region44
      $region43: #{tpu_custom_call.1} parent=5 // pred_region
        %s285 = ssub.s32 %s22, 1
        %s286 = sand.u32 %s35, 1
        %s287 = scalar_lea.sflag [#allocation3], %s286
        %s288 = sand.u32 %s35, 1
        %s289 = smul.addr %s288, 64
        %s290 = scalar_lea.vmem [#allocation2], %s289
        // Predicated region
        $region45: #{tpu_custom_call.1} parent=43 // pred_check
          %p291 = pneg %p48
        $region46: #{tpu_custom_call.1} parent=43 // pred_check_branch
          %293 = sbr.rel (%p291) target = $region48
        $region47: #{tpu_custom_call.1} parent=43 // pred_region
          %294 = dma.done %s287, 1024
        $region48: #{tpu_custom_call.1} parent=43 // pred_fallthru
          _
        %s295 = sand.u32 %s27, 1
        %s296 = scalar_lea.sflag [#allocation6], %s295
        %s297 = sand.u32 %s61, 1
        %s298 = smul.addr %s297, 64
        %s299 = scalar_lea.vmem [#allocation5], %s298
        // Predicated region
        $region49: #{tpu_custom_call.1} parent=43 // pred_check
          %p300 = pneg %p74
        $region50: #{tpu_custom_call.1} parent=43 // pred_check_branch
          %302 = sbr.rel (%p300) target = $region52
        $region51: #{tpu_custom_call.1} parent=43 // pred_region
          %303 = dma.done %s296, 1024
        $region52: #{tpu_custom_call.1} parent=43 // pred_fallthru
          _
        // Predicated region
        $region53: #{tpu_custom_call.1} parent=43 // pred_check
          %p304 = pneg %p95
        $region54: #{tpu_custom_call.1} parent=43 // pred_check_branch
          %306 = sbr.rel (%p304) target = $region56
        $region55: #{tpu_custom_call.1} parent=43 // pred_region
          %307 = dma.done [#allocation6], 512
        $region56: #{tpu_custom_call.1} parent=43 // pred_fallthru
          _
        // Predicated region
        $region57: #{tpu_custom_call.1} parent=43 // pred_check
          %p308 = pneg %p137
        $region58: #{tpu_custom_call.1} parent=43 // pred_check_branch
          %310 = sbr.rel (%p308) target = $region60
        $region59: #{tpu_custom_call.1} parent=43 // pred_region
          %311 = dma.done [#allocation9], 2048
        $region60: #{tpu_custom_call.1} parent=43 // pred_fallthru
          _
        %s312 = sand.u32 %s35, 1
        %s313 = scalar_lea.sflag [#allocation3], %s312
        %s314 = sand.u32 %s35, 1
        %s315 = smul.addr %s314, 64
        %s316 = scalar_lea.vmem [#allocation2], %s315
        %p317 = pneg %p48
        %p318 = pneg %p45
        %s319 = sand.u32 %s27, 1
        %s320 = scalar_lea.sflag [#allocation6], %s319
        %s321 = sand.u32 %s61, 1
        %s322 = smul.addr %s321, 64
        %s323 = scalar_lea.vmem [#allocation5], %s322
        %p324 = pneg %p74
        %p325 = pneg %p71
        %p326 = pneg %p95
        %p327 = pneg %p92
        %p328 = pneg %p116
        %p329 = pneg %p113
        %p330 = pneg %p137
        %p331 = pneg %p134
        %p332 = pneg %p158
        %p333 = pneg %p155
        %p334 = pneg %p184
        %p335 = pneg %p181
        %s336 = sand.u32 %s171, 1
        %s337 = scalar_lea.sflag [#allocation4], %s336
        %s338 = sand.u32 %s171, 1
        %s339 = smul.addr %s338, 8
        %s340 = scalar_lea.vmem [#allocation10], %s339
        %s341 = smul.u32 4, %s27
        %s342 = smul.u32 4, %s27
        %v343 = vld [vmem:[#allocation7] sm:$0xff]
        %v344 = vld [vmem:[#allocation7 + $0x8] sm:$0xff]
        %v345 = vld [vmem:[#allocation7 + $0x10] sm:$0xff]
        %v346 = vld [vmem:[#allocation7 + $0x18] sm:$0xff]
        %v347 = vld [vmem:[%s3] sm:$0x1]
        %v348 = vld [vmem:[#allocation8] sm:$0xff]
        %v349 = vld [vmem:[#allocation8 + $0x8] sm:$0xff]
        %v350 = vld [vmem:[#allocation8 + $0x10] sm:$0xff]
        %v351 = vld [vmem:[#allocation8 + $0x18] sm:$0xff]
        %v352 = vld [vmem:[#allocation8 + $0x20] sm:$0xff]
        %v353 = vld [vmem:[#allocation8 + $0x28] sm:$0xff]
        %v354 = vld [vmem:[#allocation8 + $0x30] sm:$0xff]
        %v355 = vld [vmem:[#allocation8 + $0x38] sm:$0xff]
        %v356 = vld [vmem:[#allocation8 + $0x40] sm:$0xff]
        %v357 = vld [vmem:[#allocation8 + $0x48] sm:$0xff]
        %v358 = vld [vmem:[#allocation8 + $0x50] sm:$0xff]
        %v359 = vld [vmem:[#allocation8 + $0x58] sm:$0xff]
        %v360 = vld [vmem:[#allocation8 + $0x60] sm:$0xff]
        %v361 = vld [vmem:[#allocation8 + $0x68] sm:$0xff]
        %v362 = vld [vmem:[#allocation8 + $0x70] sm:$0xff]
        %v363 = vld [vmem:[#allocation8 + $0x78] sm:$0xff]
        %v364 = vld [vmem:[%s5] sm:$0x1]
        %v365 = vld [vmem:[%s299] sm:$0xff]
        %v366 = vld [vmem:[%s299 + $0x8] sm:$0xff]
        %v367 = vld [vmem:[%s299 + $0x10] sm:$0xff]
        %v368 = vld [vmem:[%s299 + $0x18] sm:$0xff]
        %v369 = vld [vmem:[%s299 + $0x20] sm:$0xff]
        %v370 = vld [vmem:[%s299 + $0x28] sm:$0xff]
        %v371 = vld [vmem:[%s299 + $0x30] sm:$0xff]
        %v372 = vld [vmem:[%s299 + $0x38] sm:$0xff]
        %v374 = vlaneseq
        %v375 = vshrl.u32 %v374, 7
        %v376 = vsub.s32 0, %v375
        %v377 = vrot.slane %v347, %v376
        %vm379 = vcmask 261120
        %v381 = vsel %vm379, %v365, 0
        %v384 = vsel %vm379, %v366, 0
        %v387 = vsel %vm379, %v367, 0
        %v390 = vsel %vm379, %v368, 0
        %v393 = vsel %vm379, %v369, 0
        %v396 = vsel %vm379, %v370, 0
        %v399 = vsel %vm379, %v371, 0
        %v402 = vsel %vm379, %v372, 0
        %404 = vmatprep.subr.mxu0 0.0
        %405 = vmatpush1.msra.mxu0 %v343
        %406 = vmatprep.subr.mxu0 0.0
        %407 = vmatpush1.msra.mxu0 %v344
        %408 = vmatprep.subr.mxu0 0.0
        %409 = vmatpush1.msra.mxu0 %v345
        %410 = vmatprep.subr.mxu0 0.0
        %411 = vmatpush1.msra.mxu0 %v346
        %412 = vmatprep.subr.mxu0 0.0
        %413 = vmatpush1.msra.mxu0 0.0
        %414 = vmatprep.subr.mxu0 0.0
        %415 = vmatpush1.msra.mxu0 0.0
        %416 = vmatprep.subr.mxu0 0.0
        %417 = vmatpush1.msra.mxu0 0.0
        %418 = vmatprep.subr.mxu0 0.0
        %419 = vmatpush1.msra.mxu0 0.0
        %420 = vmatprep.subr.mxu0 0.0
        %421 = vmatpush1.msra.mxu0 0.0
        %422 = vmatprep.subr.mxu0 0.0
        %423 = vmatpush1.msra.mxu0 0.0
        %424 = vmatprep.subr.mxu0 0.0
        %425 = vmatpush1.msra.mxu0 0.0
        %426 = vmatprep.subr.mxu0 0.0
        %427 = vmatpush1.msra.mxu0 0.0
        %428 = vmatprep.subr.mxu0 0.0
        %429 = vmatpush1.msra.mxu0 0.0
        %430 = vmatprep.subr.mxu0 0.0
        %431 = vmatpush1.msra.mxu0 0.0
        %432 = vmatprep.subr.mxu0 0.0
        %433 = vmatpush1.msra.mxu0 0.0
        %434 = vmatprep.subr.mxu0 0.0
        %435 = vmatpush1.msra.mxu0 0.0
        %436 = vmatprep.subr.mxu0 0.0
        %437 = vmatpush1.msra.mxu0 0.0
        %438 = vmatprep.subr.mxu0 0.0
        %439 = vmatpush1.msra.mxu0 0.0
        %440 = vmatprep.subr.mxu0 0.0
        %441 = vmatpush1.msra.mxu0 0.0
        %442 = vmatprep.subr.mxu0 0.0
        %443 = vmatpush1.msra.mxu0 0.0
        %444 = vmatprep.subr.mxu0 0.0
        %445 = vmatpush1.msra.mxu0 0.0
        %446 = vmatprep.subr.mxu0 0.0
        %447 = vmatpush1.msra.mxu0 0.0
        %448 = vmatprep.subr.mxu0 0.0
        %449 = vmatpush1.msra.mxu0 0.0
        %450 = vmatprep.subr.mxu0 0.0
        %451 = vmatpush1.msra.mxu0 0.0
        %452 = vmatprep.subr.mxu0 0.0
        %453 = vmatpush1.msra.mxu0 0.0
        %454 = vmatprep.subr.mxu0 0.0
        %455 = vmatpush1.msra.mxu0 0.0
        %456 = vmatprep.subr.mxu0 0.0
        %457 = vmatpush1.msra.mxu0 0.0
        %458 = vmatprep.subr.mxu0 0.0
        %459 = vmatpush1.msra.mxu0 0.0
        %460 = vmatprep.subr.mxu0 0.0
        %461 = vmatpush1.msra.mxu0 0.0
        %462 = vmatprep.subr.mxu0 0.0
        %463 = vmatpush1.msra.mxu0 0.0
        %464 = vmatprep.subr.mxu0 0.0
        %465 = vmatpush1.msra.mxu0 0.0
        %466 = vmatprep.subr.mxu0 0.0
        %467 = vmatpush1.msra.mxu0 0.0
        %468 = vmatprep.mubr.f32.mxu0 0.0
        %469 = vmatmul.mubr.f32.gmra.mrb[0].mxu0 %v381
        %v470 = vpop.f32.mrb[0].mxu0
        %v471 = vadd.f32 %v377, %v470
        %v472 = vpop.f32.mrb[0].mxu0
        %473 = vmatprep.mubr.f32.mxu0 0.0
        %474 = vmatmul.mubr.f32.gmra.mrb[0].mxu0 %v384
        %v475 = vpop.f32.mrb[0].mxu0
        %v476 = vadd.f32 %v377, %v475
        %v477 = vpop.f32.mrb[0].mxu0
        %478 = vmatprep.mubr.f32.mxu0 0.0
        %479 = vmatmul.mubr.f32.gmra.mrb[0].mxu0 %v387
        %v480 = vpop.f32.mrb[0].mxu0
        %v481 = vadd.f32 %v377, %v480
        %v482 = vpop.f32.mrb[0].mxu0
        %483 = vmatprep.mubr.f32.mxu0 0.0
        %484 = vmatmul.mubr.f32.gmra.mrb[0].mxu0 %v390
        %v485 = vpop.f32.mrb[0].mxu0
        %v486 = vadd.f32 %v377, %v485
        %v487 = vpop.f32.mrb[0].mxu0
        %488 = vmatprep.mubr.f32.mxu0 0.0
        %489 = vmatmul.mubr.f32.gmra.mrb[0].mxu0 %v393
        %v490 = vpop.f32.mrb[0].mxu0
        %v491 = vadd.f32 %v377, %v490
        %v492 = vpop.f32.mrb[0].mxu0
        %493 = vmatprep.mubr.f32.mxu0 0.0
        %494 = vmatmul.mubr.f32.gmra.mrb[0].mxu0 %v396
        %v495 = vpop.f32.mrb[0].mxu0
        %v496 = vadd.f32 %v377, %v495
        %v497 = vpop.f32.mrb[0].mxu0
        %498 = vmatprep.mubr.f32.mxu0 0.0
        %499 = vmatmul.mubr.f32.gmra.mrb[0].mxu0 %v399
        %v500 = vpop.f32.mrb[0].mxu0
        %v501 = vadd.f32 %v377, %v500
        %v502 = vpop.f32.mrb[0].mxu0
        %503 = vmatprep.mubr.f32.mxu0 0.0
        %504 = vmatmul.mubr.f32.gmra.mrb[0].mxu0 %v402
        %v505 = vpop.f32.mrb[0].mxu0
        %v506 = vadd.f32 %v377, %v505
        %v507 = vpop.f32.mrb[0].mxu0
        %508 = vdwg.mxu0
        %v509 = vld [vmem:[%s290] sm:$0xff]
        %v510 = vld [vmem:[%s290 + $0x8] sm:$0xff]
        %v511 = vld [vmem:[%s290 + $0x10] sm:$0xff]
        %v512 = vld [vmem:[%s290 + $0x18] sm:$0xff]
        %v513 = vld [vmem:[%s290 + $0x20] sm:$0xff]
        %v514 = vld [vmem:[%s290 + $0x28] sm:$0xff]
        %v515 = vld [vmem:[%s290 + $0x30] sm:$0xff]
        %v516 = vld [vmem:[%s290 + $0x38] sm:$0xff]
        %vm517 = vcmask 130048
        %v519 = vsel %vm517, %v509, 0
        %v522 = vsel %vm517, %v510, 0
        %524 = vmatprep.subr.mxu0 0.0
        %525 = vmatpush1.msra.mxu0 %v471
        %526 = vmatprep.subr.mxu0 0.0
        %527 = vmatpush1.msra.mxu0 %v476
        %528 = vmatprep.subr.mxu0 0.0
        %529 = vmatpush1.msra.mxu0 0.0
        %530 = vmatprep.subr.mxu0 0.0
        %531 = vmatpush1.msra.mxu0 0.0
        %532 = vmatprep.subr.mxu0 0.0
        %533 = vmatpush1.msra.mxu0 0.0
        %534 = vmatprep.subr.mxu0 0.0
        %535 = vmatpush1.msra.mxu0 0.0
        %536 = vmatprep.subr.mxu0 0.0
        %537 = vmatpush1.msra.mxu0 0.0
        %538 = vmatprep.subr.mxu0 0.0
        %539 = vmatpush1.msra.mxu0 0.0
        %540 = vmatprep.subr.mxu0 0.0
        %541 = vmatpush1.msra.mxu0 0.0
        %542 = vmatprep.subr.mxu0 0.0
        %543 = vmatpush1.msra.mxu0 0.0
        %544 = vmatprep.subr.mxu0 0.0
        %545 = vmatpush1.msra.mxu0 0.0
        %546 = vmatprep.subr.mxu0 0.0
        %547 = vmatpush1.msra.mxu0 0.0
        %548 = vmatprep.subr.mxu0 0.0
        %549 = vmatpush1.msra.mxu0 0.0
        %550 = vmatprep.subr.mxu0 0.0
        %551 = vmatpush1.msra.mxu0 0.0
        %552 = vmatprep.subr.mxu0 0.0
        %553 = vmatpush1.msra.mxu0 0.0
        %554 = vmatprep.subr.mxu0 0.0
        %555 = vmatpush1.msra.mxu0 0.0
        %556 = vmatprep.subr.mxu0 0.0
        %557 = vmatpush1.msra.mxu0 0.0
        %558 = vmatprep.subr.mxu0 0.0
        %559 = vmatpush1.msra.mxu0 0.0
        %560 = vmatprep.subr.mxu0 0.0
        %561 = vmatpush1.msra.mxu0 0.0
        %562 = vmatprep.subr.mxu0 0.0
        %563 = vmatpush1.msra.mxu0 0.0
        %564 = vmatprep.subr.mxu0 0.0
        %565 = vmatpush1.msra.mxu0 0.0
        %566 = vmatprep.subr.mxu0 0.0
        %567 = vmatpush1.msra.mxu0 0.0
        %568 = vmatprep.subr.mxu0 0.0
        %569 = vmatpush1.msra.mxu0 0.0
        %570 = vmatprep.subr.mxu0 0.0
        %571 = vmatpush1.msra.mxu0 0.0
        %572 = vmatprep.subr.mxu0 0.0
        %573 = vmatpush1.msra.mxu0 0.0
        %574 = vmatprep.subr.mxu0 0.0
        %575 = vmatpush1.msra.mxu0 0.0
        %576 = vmatprep.subr.mxu0 0.0
        %577 = vmatpush1.msra.mxu0 0.0
        %578 = vmatprep.subr.mxu0 0.0
        %579 = vmatpush1.msra.mxu0 0.0
        %580 = vmatprep.subr.mxu0 0.0
        %581 = vmatpush1.msra.mxu0 0.0
        %582 = vmatprep.subr.mxu0 0.0
        %583 = vmatpush1.msra.mxu0 0.0
        %584 = vmatprep.subr.mxu0 0.0
        %585 = vmatpush1.msra.mxu0 0.0
        %586 = vmatprep.subr.mxu0 0.0
        %587 = vmatpush1.msra.mxu0 0.0
        %588 = vmatprep.mubr.f32.mxu0 0.0
        %589 = vmatmul.mubr.f32.gmra.mrb[0].mxu0 %v519
        %v590 = vpop.f32.mrb[0].mxu0
        %v591 = vadd.f32 0.0, %v590
        %v592 = vpop.f32.mrb[0].mxu0
        %593 = vmatprep.mubr.f32.mxu0 0.0
        %594 = vmatmul.mubr.f32.gmra.mrb[0].mxu0 %v522
        %v595 = vpop.f32.mrb[0].mxu0
        %v596 = vadd.f32 0.0, %v595
        %v597 = vpop.f32.mrb[0].mxu0
        %598 = vdwg.mxu0
        %v600 = vsel %vm517, %v511, 0
        %v603 = vsel %vm517, %v512, 0
        %605 = vmatprep.subr.mxu0 0.0
        %606 = vmatpush1.msra.mxu0 %v481
        %607 = vmatprep.subr.mxu0 0.0
        %608 = vmatpush1.msra.mxu0 %v486
        %609 = vmatprep.subr.mxu0 0.0
        %610 = vmatpush1.msra.mxu0 0.0
        %611 = vmatprep.subr.mxu0 0.0
        %612 = vmatpush1.msra.mxu0 0.0
        %613 = vmatprep.subr.mxu0 0.0
        %614 = vmatpush1.msra.mxu0 0.0
        %615 = vmatprep.subr.mxu0 0.0
        %616 = vmatpush1.msra.mxu0 0.0
        %617 = vmatprep.subr.mxu0 0.0
        %618 = vmatpush1.msra.mxu0 0.0
        %619 = vmatprep.subr.mxu0 0.0
        %620 = vmatpush1.msra.mxu0 0.0
        %621 = vmatprep.subr.mxu0 0.0
        %622 = vmatpush1.msra.mxu0 0.0
        %623 = vmatprep.subr.mxu0 0.0
        %624 = vmatpush1.msra.mxu0 0.0
        %625 = vmatprep.subr.mxu0 0.0
        %626 = vmatpush1.msra.mxu0 0.0
        %627 = vmatprep.subr.mxu0 0.0
        %628 = vmatpush1.msra.mxu0 0.0
        %629 = vmatprep.subr.mxu0 0.0
        %630 = vmatpush1.msra.mxu0 0.0
        %631 = vmatprep.subr.mxu0 0.0
        %632 = vmatpush1.msra.mxu0 0.0
        %633 = vmatprep.subr.mxu0 0.0
        %634 = vmatpush1.msra.mxu0 0.0
        %635 = vmatprep.subr.mxu0 0.0
        %636 = vmatpush1.msra.mxu0 0.0
        %637 = vmatprep.subr.mxu0 0.0
        %638 = vmatpush1.msra.mxu0 0.0
        %639 = vmatprep.subr.mxu0 0.0
        %640 = vmatpush1.msra.mxu0 0.0
        %641 = vmatprep.subr.mxu0 0.0
        %642 = vmatpush1.msra.mxu0 0.0
        %643 = vmatprep.subr.mxu0 0.0
        %644 = vmatpush1.msra.mxu0 0.0
        %645 = vmatprep.subr.mxu0 0.0
        %646 = vmatpush1.msra.mxu0 0.0
        %647 = vmatprep.subr.mxu0 0.0
        %648 = vmatpush1.msra.mxu0 0.0
        %649 = vmatprep.subr.mxu0 0.0
        %650 = vmatpush1.msra.mxu0 0.0
        %651 = vmatprep.subr.mxu0 0.0
        %652 = vmatpush1.msra.mxu0 0.0
        %653 = vmatprep.subr.mxu0 0.0
        %654 = vmatpush1.msra.mxu0 0.0
        %655 = vmatprep.subr.mxu0 0.0
        %656 = vmatpush1.msra.mxu0 0.0
        %657 = vmatprep.subr.mxu0 0.0
        %658 = vmatpush1.msra.mxu0 0.0
        %659 = vmatprep.subr.mxu0 0.0
        %660 = vmatpush1.msra.mxu0 0.0
        %661 = vmatprep.subr.mxu0 0.0
        %662 = vmatpush1.msra.mxu0 0.0
        %663 = vmatprep.subr.mxu0 0.0
        %664 = vmatpush1.msra.mxu0 0.0
        %665 = vmatprep.subr.mxu0 0.0
        %666 = vmatpush1.msra.mxu0 0.0
        %667 = vmatprep.subr.mxu0 0.0
        %668 = vmatpush1.msra.mxu0 0.0
        %669 = vmatprep.mubr.f32.mxu0 0.0
        %670 = vmatmul.mubr.f32.gmra.mrb[0].mxu0 %v600
        %v671 = vpop.f32.mrb[0].mxu0
        %v672 = vadd.f32 0.0, %v671
        %v673 = vpop.f32.mrb[0].mxu0
        %674 = vmatprep.mubr.f32.mxu0 0.0
        %675 = vmatmul.mubr.f32.gmra.mrb[0].mxu0 %v603
        %v676 = vpop.f32.mrb[0].mxu0
        %v677 = vadd.f32 0.0, %v676
        %v678 = vpop.f32.mrb[0].mxu0
        %679 = vdwg.mxu0
        %v681 = vsel %vm517, %v513, 0
        %v684 = vsel %vm517, %v514, 0
        %686 = vmatprep.subr.mxu0 0.0
        %687 = vmatpush1.msra.mxu0 %v491
        %688 = vmatprep.subr.mxu0 0.0
        %689 = vmatpush1.msra.mxu0 %v496
        %690 = vmatprep.subr.mxu0 0.0
        %691 = vmatpush1.msra.mxu0 0.0
        %692 = vmatprep.subr.mxu0 0.0
        %693 = vmatpush1.msra.mxu0 0.0
        %694 = vmatprep.subr.mxu0 0.0
        %695 = vmatpush1.msra.mxu0 0.0
        %696 = vmatprep.subr.mxu0 0.0
        %697 = vmatpush1.msra.mxu0 0.0
        %698 = vmatprep.subr.mxu0 0.0
        %699 = vmatpush1.msra.mxu0 0.0
        %700 = vmatprep.subr.mxu0 0.0
        %701 = vmatpush1.msra.mxu0 0.0
        %702 = vmatprep.subr.mxu0 0.0
        %703 = vmatpush1.msra.mxu0 0.0
        %704 = vmatprep.subr.mxu0 0.0
        %705 = vmatpush1.msra.mxu0 0.0
        %706 = vmatprep.subr.mxu0 0.0
        %707 = vmatpush1.msra.mxu0 0.0
        %708 = vmatprep.subr.mxu0 0.0
        %709 = vmatpush1.msra.mxu0 0.0
        %710 = vmatprep.subr.mxu0 0.0
        %711 = vmatpush1.msra.mxu0 0.0
        %712 = vmatprep.subr.mxu0 0.0
        %713 = vmatpush1.msra.mxu0 0.0
        %714 = vmatprep.subr.mxu0 0.0
        %715 = vmatpush1.msra.mxu0 0.0
        %716 = vmatprep.subr.mxu0 0.0
        %717 = vmatpush1.msra.mxu0 0.0
        %718 = vmatprep.subr.mxu0 0.0
        %719 = vmatpush1.msra.mxu0 0.0
        %720 = vmatprep.subr.mxu0 0.0
        %721 = vmatpush1.msra.mxu0 0.0
        %722 = vmatprep.subr.mxu0 0.0
        %723 = vmatpush1.msra.mxu0 0.0
        %724 = vmatprep.subr.mxu0 0.0
        %725 = vmatpush1.msra.mxu0 0.0
        %726 = vmatprep.subr.mxu0 0.0
        %727 = vmatpush1.msra.mxu0 0.0
        %728 = vmatprep.subr.mxu0 0.0
        %729 = vmatpush1.msra.mxu0 0.0
        %730 = vmatprep.subr.mxu0 0.0
        %731 = vmatpush1.msra.mxu0 0.0
        %732 = vmatprep.subr.mxu0 0.0
        %733 = vmatpush1.msra.mxu0 0.0
        %734 = vmatprep.subr.mxu0 0.0
        %735 = vmatpush1.msra.mxu0 0.0
        %736 = vmatprep.subr.mxu0 0.0
        %737 = vmatpush1.msra.mxu0 0.0
        %738 = vmatprep.subr.mxu0 0.0
        %739 = vmatpush1.msra.mxu0 0.0
        %740 = vmatprep.subr.mxu0 0.0
        %741 = vmatpush1.msra.mxu0 0.0
        %742 = vmatprep.subr.mxu0 0.0
        %743 = vmatpush1.msra.mxu0 0.0
        %744 = vmatprep.subr.mxu0 0.0
        %745 = vmatpush1.msra.mxu0 0.0
        %746 = vmatprep.subr.mxu0 0.0
        %747 = vmatpush1.msra.mxu0 0.0
        %748 = vmatprep.subr.mxu0 0.0
        %749 = vmatpush1.msra.mxu0 0.0
        %750 = vmatprep.mubr.f32.mxu0 0.0
        %751 = vmatmul.mubr.f32.gmra.mrb[0].mxu0 %v681
        %v752 = vpop.f32.mrb[0].mxu0
        %v753 = vadd.f32 0.0, %v752
        %v754 = vpop.f32.mrb[0].mxu0
        %755 = vmatprep.mubr.f32.mxu0 0.0
        %756 = vmatmul.mubr.f32.gmra.mrb[0].mxu0 %v684
        %v757 = vpop.f32.mrb[0].mxu0
        %v758 = vadd.f32 0.0, %v757
        %v759 = vpop.f32.mrb[0].mxu0
        %760 = vdwg.mxu0
        %v762 = vsel %vm517, %v515, 0
        %v765 = vsel %vm517, %v516, 0
        %767 = vmatprep.subr.mxu0 0.0
        %768 = vmatpush1.msra.mxu0 %v501
        %769 = vmatprep.subr.mxu0 0.0
        %770 = vmatpush1.msra.mxu0 %v506
        %771 = vmatprep.subr.mxu0 0.0
        %772 = vmatpush1.msra.mxu0 0.0
        %773 = vmatprep.subr.mxu0 0.0
        %774 = vmatpush1.msra.mxu0 0.0
        %775 = vmatprep.subr.mxu0 0.0
        %776 = vmatpush1.msra.mxu0 0.0
        %777 = vmatprep.subr.mxu0 0.0
        %778 = vmatpush1.msra.mxu0 0.0
        %779 = vmatprep.subr.mxu0 0.0
        %780 = vmatpush1.msra.mxu0 0.0
        %781 = vmatprep.subr.mxu0 0.0
        %782 = vmatpush1.msra.mxu0 0.0
        %783 = vmatprep.subr.mxu0 0.0
        %784 = vmatpush1.msra.mxu0 0.0
        %785 = vmatprep.subr.mxu0 0.0
        %786 = vmatpush1.msra.mxu0 0.0
        %787 = vmatprep.subr.mxu0 0.0
        %788 = vmatpush1.msra.mxu0 0.0
        %789 = vmatprep.subr.mxu0 0.0
        %790 = vmatpush1.msra.mxu0 0.0
        %791 = vmatprep.subr.mxu0 0.0
        %792 = vmatpush1.msra.mxu0 0.0
        %793 = vmatprep.subr.mxu0 0.0
        %794 = vmatpush1.msra.mxu0 0.0
        %795 = vmatprep.subr.mxu0 0.0
        %796 = vmatpush1.msra.mxu0 0.0
        %797 = vmatprep.subr.mxu0 0.0
        %798 = vmatpush1.msra.mxu0 0.0
        %799 = vmatprep.subr.mxu0 0.0
        %800 = vmatpush1.msra.mxu0 0.0
        %801 = vmatprep.subr.mxu0 0.0
        %802 = vmatpush1.msra.mxu0 0.0
        %803 = vmatprep.subr.mxu0 0.0
        %804 = vmatpush1.msra.mxu0 0.0
        %805 = vmatprep.subr.mxu0 0.0
        %806 = vmatpush1.msra.mxu0 0.0
        %807 = vmatprep.subr.mxu0 0.0
        %808 = vmatpush1.msra.mxu0 0.0
        %809 = vmatprep.subr.mxu0 0.0
        %810 = vmatpush1.msra.mxu0 0.0
        %811 = vmatprep.subr.mxu0 0.0
        %812 = vmatpush1.msra.mxu0 0.0
        %813 = vmatprep.subr.mxu0 0.0
        %814 = vmatpush1.msra.mxu0 0.0
        %815 = vmatprep.subr.mxu0 0.0
        %816 = vmatpush1.msra.mxu0 0.0
        %817 = vmatprep.subr.mxu0 0.0
        %818 = vmatpush1.msra.mxu0 0.0
        %819 = vmatprep.subr.mxu0 0.0
        %820 = vmatpush1.msra.mxu0 0.0
        %821 = vmatprep.subr.mxu0 0.0
        %822 = vmatpush1.msra.mxu0 0.0
        %823 = vmatprep.subr.mxu0 0.0
        %824 = vmatpush1.msra.mxu0 0.0
        %825 = vmatprep.subr.mxu0 0.0
        %826 = vmatpush1.msra.mxu0 0.0
        %827 = vmatprep.subr.mxu0 0.0
        %828 = vmatpush1.msra.mxu0 0.0
        %829 = vmatprep.subr.mxu0 0.0
        %830 = vmatpush1.msra.mxu0 0.0
        %831 = vmatprep.mubr.f32.mxu0 0.0
        %832 = vmatmul.mubr.f32.gmra.mrb[0].mxu0 %v762
        %v833 = vpop.f32.mrb[0].mxu0
        %v834 = vadd.f32 0.0, %v833
        %v835 = vpop.f32.mrb[0].mxu0
        %836 = vmatprep.mubr.f32.mxu0 0.0
        %837 = vmatmul.mubr.f32.gmra.mrb[0].mxu0 %v765
        %v838 = vpop.f32.mrb[0].mxu0
        %v839 = vadd.f32 0.0, %v838
        %v840 = vpop.f32.mrb[0].mxu0
        %841 = vdwg.mxu0
        %v842 = vmax.f32 %v591, 0.0
        %v843 = vmax.f32 %v596, 0.0
        %v844 = vmax.f32 %v672, 0.0
        %v845 = vmax.f32 %v677, 0.0
        %v846 = vmax.f32 %v753, 0.0
        %v847 = vmax.f32 %v758, 0.0
        %v848 = vmax.f32 %v834, 0.0
        %v849 = vmax.f32 %v839, 0.0
        %v851 = vlaneseq
        %v852 = vshrl.u32 %v851, 7
        %v853 = vsub.s32 0, %v852
        %v854 = vrot.slane %v364, %v853
        %856 = vmatprep.subr.mxu0 0.0
        %857 = vmatpush1.msra.mxu0 %v348
        %858 = vmatprep.subr.mxu0 0.0
        %859 = vmatpush1.msra.mxu0 %v349
        %860 = vmatprep.subr.mxu0 0.0
        %861 = vmatpush1.msra.mxu0 %v350
        %862 = vmatprep.subr.mxu0 0.0
        %863 = vmatpush1.msra.mxu0 %v351
        %864 = vmatprep.subr.mxu0 0.0
        %865 = vmatpush1.msra.mxu0 %v352
        %866 = vmatprep.subr.mxu0 0.0
        %867 = vmatpush1.msra.mxu0 %v353
        %868 = vmatprep.subr.mxu0 0.0
        %869 = vmatpush1.msra.mxu0 %v354
        %870 = vmatprep.subr.mxu0 0.0
        %871 = vmatpush1.msra.mxu0 %v355
        %872 = vmatprep.subr.mxu0 0.0
        %873 = vmatpush1.msra.mxu0 %v356
        %874 = vmatprep.subr.mxu0 0.0
        %875 = vmatpush1.msra.mxu0 %v357
        %876 = vmatprep.subr.mxu0 0.0
        %877 = vmatpush1.msra.mxu0 %v358
        %878 = vmatprep.subr.mxu0 0.0
        %879 = vmatpush1.msra.mxu0 %v359
        %880 = vmatprep.subr.mxu0 0.0
        %881 = vmatpush1.msra.mxu0 %v360
        %882 = vmatprep.subr.mxu0 0.0
        %883 = vmatpush1.msra.mxu0 %v361
        %884 = vmatprep.subr.mxu0 0.0
        %885 = vmatpush1.msra.mxu0 %v362
        %886 = vmatprep.subr.mxu0 0.0
        %887 = vmatpush1.msra.mxu0 %v363
        %888 = vmatprep.subr.mxu0 0.0
        %889 = vmatpush1.msra.mxu0 0.0
        %890 = vmatprep.subr.mxu0 0.0
        %891 = vmatpush1.msra.mxu0 0.0
        %892 = vmatprep.subr.mxu0 0.0
        %893 = vmatpush1.msra.mxu0 0.0
        %894 = vmatprep.subr.mxu0 0.0
        %895 = vmatpush1.msra.mxu0 0.0
        %896 = vmatprep.subr.mxu0 0.0
        %897 = vmatpush1.msra.mxu0 0.0
        %898 = vmatprep.subr.mxu0 0.0
        %899 = vmatpush1.msra.mxu0 0.0
        %900 = vmatprep.subr.mxu0 0.0
        %901 = vmatpush1.msra.mxu0 0.0
        %902 = vmatprep.subr.mxu0 0.0
        %903 = vmatpush1.msra.mxu0 0.0
        %904 = vmatprep.subr.mxu0 0.0
        %905 = vmatpush1.msra.mxu0 0.0
        %906 = vmatprep.subr.mxu0 0.0
        %907 = vmatpush1.msra.mxu0 0.0
        %908 = vmatprep.subr.mxu0 0.0
        %909 = vmatpush1.msra.mxu0 0.0
        %910 = vmatprep.subr.mxu0 0.0
        %911 = vmatpush1.msra.mxu0 0.0
        %912 = vmatprep.subr.mxu0 0.0
        %913 = vmatpush1.msra.mxu0 0.0
        %914 = vmatprep.subr.mxu0 0.0
        %915 = vmatpush1.msra.mxu0 0.0
        %916 = vmatprep.subr.mxu0 0.0
        %917 = vmatpush1.msra.mxu0 0.0
        %918 = vmatprep.subr.mxu0 0.0
        %919 = vmatpush1.msra.mxu0 0.0
        %920 = vmatprep.mubr.f32.mxu0 0.0
        %921 = vmatmul.mubr.f32.gmra.mrb[0].mxu0 %v842
        %v922 = vpop.f32.mrb[0].mxu0
        %v923 = vadd.f32 %v854, %v922
        %v924 = vpop.f32.mrb[0].mxu0
        %925 = vmatprep.mubr.f32.mxu0 0.0
        %926 = vmatmul.mubr.f32.gmra.mrb[0].mxu0 %v843
        %v927 = vpop.f32.mrb[0].mxu0
        %v928 = vadd.f32 %v854, %v927
        %v929 = vpop.f32.mrb[0].mxu0
        %930 = vmatprep.mubr.f32.mxu0 0.0
        %931 = vmatmul.mubr.f32.gmra.mrb[0].mxu0 %v844
        %v932 = vpop.f32.mrb[0].mxu0
        %v933 = vadd.f32 %v854, %v932
        %v934 = vpop.f32.mrb[0].mxu0
        %935 = vmatprep.mubr.f32.mxu0 0.0
        %936 = vmatmul.mubr.f32.gmra.mrb[0].mxu0 %v845
        %v937 = vpop.f32.mrb[0].mxu0
        %v938 = vadd.f32 %v854, %v937
        %v939 = vpop.f32.mrb[0].mxu0
        %940 = vmatprep.mubr.f32.mxu0 0.0
        %941 = vmatmul.mubr.f32.gmra.mrb[0].mxu0 %v846
        %v942 = vpop.f32.mrb[0].mxu0
        %v943 = vadd.f32 %v854, %v942
        %v944 = vpop.f32.mrb[0].mxu0
        %945 = vmatprep.mubr.f32.mxu0 0.0
        %946 = vmatmul.mubr.f32.gmra.mrb[0].mxu0 %v847
        %v947 = vpop.f32.mrb[0].mxu0
        %v948 = vadd.f32 %v854, %v947
        %v949 = vpop.f32.mrb[0].mxu0
        %950 = vmatprep.mubr.f32.mxu0 0.0
        %951 = vmatmul.mubr.f32.gmra.mrb[0].mxu0 %v848
        %v952 = vpop.f32.mrb[0].mxu0
        %v953 = vadd.f32 %v854, %v952
        %v954 = vpop.f32.mrb[0].mxu0
        %955 = vmatprep.mubr.f32.mxu0 0.0
        %956 = vmatmul.mubr.f32.gmra.mrb[0].mxu0 %v849
        %v957 = vpop.f32.mrb[0].mxu0
        %v958 = vadd.f32 %v854, %v957
        %v959 = vpop.f32.mrb[0].mxu0
        %960 = vdwg.mxu0
        %v961 = vtanh.pop %v923
        %v962 = vtanh.pop %v928
        %v963 = vtanh.pop %v933
        %v964 = vtanh.pop %v938
        %v965 = vtanh.pop %v943
        %v966 = vtanh.pop %v948
        %v967 = vtanh.pop %v953
        %v968 = vtanh.pop %v958
        %v969 = vmul.f32 %v961, 0.25
        %v970 = vmul.f32 %v962, 0.25
        %v971 = vmul.f32 %v963, 0.25
        %v972 = vmul.f32 %v964, 0.25
        %v973 = vmul.f32 %v965, 0.25
        %v974 = vmul.f32 %v966, 0.25
        %v975 = vmul.f32 %v967, 0.25
        %v976 = vmul.f32 %v968, 0.25
        %v977 = vadd.f32 %v842, %v969
        %v978 = vadd.f32 %v843, %v970
        %v979 = vadd.f32 %v844, %v971
        %v980 = vadd.f32 %v845, %v972
        %v981 = vadd.f32 %v846, %v973
        %v982 = vadd.f32 %v847, %v974
        %v983 = vadd.f32 %v848, %v975
        %v984 = vadd.f32 %v849, %v976
        %985 = vmatprep.subr.mxu0 0.0
        %986 = vmatpush1.msra.mxu0 %v348
        %987 = vmatprep.subr.mxu0 0.0
        %988 = vmatpush1.msra.mxu0 %v349
        %989 = vmatprep.subr.mxu0 0.0
        %990 = vmatpush1.msra.mxu0 %v350
        %991 = vmatprep.subr.mxu0 0.0
        %992 = vmatpush1.msra.mxu0 %v351
        %993 = vmatprep.subr.mxu0 0.0
        %994 = vmatpush1.msra.mxu0 %v352
        %995 = vmatprep.subr.mxu0 0.0
        %996 = vmatpush1.msra.mxu0 %v353
        %997 = vmatprep.subr.mxu0 0.0
        %998 = vmatpush1.msra.mxu0 %v354
        %999 = vmatprep.subr.mxu0 0.0
        %1000 = vmatpush1.msra.mxu0 %v355
        %1001 = vmatprep.subr.mxu0 0.0
        %1002 = vmatpush1.msra.mxu0 %v356
        %1003 = vmatprep.subr.mxu0 0.0
        %1004 = vmatpush1.msra.mxu0 %v357
        %1005 = vmatprep.subr.mxu0 0.0
        %1006 = vmatpush1.msra.mxu0 %v358
        %1007 = vmatprep.subr.mxu0 0.0
        %1008 = vmatpush1.msra.mxu0 %v359
        %1009 = vmatprep.subr.mxu0 0.0
        %1010 = vmatpush1.msra.mxu0 %v360
        %1011 = vmatprep.subr.mxu0 0.0
        %1012 = vmatpush1.msra.mxu0 %v361
        %1013 = vmatprep.subr.mxu0 0.0
        %1014 = vmatpush1.msra.mxu0 %v362
        %1015 = vmatprep.subr.mxu0 0.0
        %1016 = vmatpush1.msra.mxu0 %v363
        %1017 = vmatprep.subr.mxu0 0.0
        %1018 = vmatpush1.msra.mxu0 0.0
        %1019 = vmatprep.subr.mxu0 0.0
        %1020 = vmatpush1.msra.mxu0 0.0
        %1021 = vmatprep.subr.mxu0 0.0
        %1022 = vmatpush1.msra.mxu0 0.0
        %1023 = vmatprep.subr.mxu0 0.0
        %1024 = vmatpush1.msra.mxu0 0.0
        %1025 = vmatprep.subr.mxu0 0.0
        %1026 = vmatpush1.msra.mxu0 0.0
        %1027 = vmatprep.subr.mxu0 0.0
        %1028 = vmatpush1.msra.mxu0 0.0
        %1029 = vmatprep.subr.mxu0 0.0
        %1030 = vmatpush1.msra.mxu0 0.0
        %1031 = vmatprep.subr.mxu0 0.0
        %1032 = vmatpush1.msra.mxu0 0.0
        %1033 = vmatprep.subr.mxu0 0.0
        %1034 = vmatpush1.msra.mxu0 0.0
        %1035 = vmatprep.subr.mxu0 0.0
        %1036 = vmatpush1.msra.mxu0 0.0
        %1037 = vmatprep.subr.mxu0 0.0
        %1038 = vmatpush1.msra.mxu0 0.0
        %1039 = vmatprep.subr.mxu0 0.0
        %1040 = vmatpush1.msra.mxu0 0.0
        %1041 = vmatprep.subr.mxu0 0.0
        %1042 = vmatpush1.msra.mxu0 0.0
        %1043 = vmatprep.subr.mxu0 0.0
        %1044 = vmatpush1.msra.mxu0 0.0
        %1045 = vmatprep.subr.mxu0 0.0
        %1046 = vmatpush1.msra.mxu0 0.0
        %1047 = vmatprep.subr.mxu0 0.0
        %1048 = vmatpush1.msra.mxu0 0.0
        %1049 = vmatprep.mubr.f32.mxu0 0.0
        %1050 = vmatmul.mubr.f32.gmra.mrb[0].mxu0 %v977
        %v1051 = vpop.f32.mrb[0].mxu0
        %v1052 = vadd.f32 %v854, %v1051
        %v1053 = vpop.f32.mrb[0].mxu0
        %1054 = vmatprep.mubr.f32.mxu0 0.0
        %1055 = vmatmul.mubr.f32.gmra.mrb[0].mxu0 %v978
        %v1056 = vpop.f32.mrb[0].mxu0
        %v1057 = vadd.f32 %v854, %v1056
        %v1058 = vpop.f32.mrb[0].mxu0
        %1059 = vmatprep.mubr.f32.mxu0 0.0
        %1060 = vmatmul.mubr.f32.gmra.mrb[0].mxu0 %v979
        %v1061 = vpop.f32.mrb[0].mxu0
        %v1062 = vadd.f32 %v854, %v1061
        %v1063 = vpop.f32.mrb[0].mxu0
        %1064 = vmatprep.mubr.f32.mxu0 0.0
        %1065 = vmatmul.mubr.f32.gmra.mrb[0].mxu0 %v980
        %v1066 = vpop.f32.mrb[0].mxu0
        %v1067 = vadd.f32 %v854, %v1066
        %v1068 = vpop.f32.mrb[0].mxu0
        %1069 = vmatprep.mubr.f32.mxu0 0.0
        %1070 = vmatmul.mubr.f32.gmra.mrb[0].mxu0 %v981
        %v1071 = vpop.f32.mrb[0].mxu0
        %v1072 = vadd.f32 %v854, %v1071
        %v1073 = vpop.f32.mrb[0].mxu0
        %1074 = vmatprep.mubr.f32.mxu0 0.0
        %1075 = vmatmul.mubr.f32.gmra.mrb[0].mxu0 %v982
        %v1076 = vpop.f32.mrb[0].mxu0
        %v1077 = vadd.f32 %v854, %v1076
        %v1078 = vpop.f32.mrb[0].mxu0
        %1079 = vmatprep.mubr.f32.mxu0 0.0
        %1080 = vmatmul.mubr.f32.gmra.mrb[0].mxu0 %v983
        %v1081 = vpop.f32.mrb[0].mxu0
        %v1082 = vadd.f32 %v854, %v1081
        %v1083 = vpop.f32.mrb[0].mxu0
        %1084 = vmatprep.mubr.f32.mxu0 0.0
        %1085 = vmatmul.mubr.f32.gmra.mrb[0].mxu0 %v984
        %v1086 = vpop.f32.mrb[0].mxu0
        %v1087 = vadd.f32 %v854, %v1086
        %v1088 = vpop.f32.mrb[0].mxu0
        %1089 = vdwg.mxu0
        %v1090 = vtanh.pop %v1052
        %v1091 = vtanh.pop %v1057
        %v1092 = vtanh.pop %v1062
        %v1093 = vtanh.pop %v1067
        %v1094 = vtanh.pop %v1072
        %v1095 = vtanh.pop %v1077
        %v1096 = vtanh.pop %v1082
        %v1097 = vtanh.pop %v1087
        %v1098 = vmul.f32 %v1090, 0.25
        %v1099 = vmul.f32 %v1091, 0.25
        %v1100 = vmul.f32 %v1092, 0.25
        %v1101 = vmul.f32 %v1093, 0.25
        %v1102 = vmul.f32 %v1094, 0.25
        %v1103 = vmul.f32 %v1095, 0.25
        %v1104 = vmul.f32 %v1096, 0.25
        %v1105 = vmul.f32 %v1097, 0.25
        %v1106 = vadd.f32 %v977, %v1098
        %v1107 = vadd.f32 %v978, %v1099
        %v1108 = vadd.f32 %v979, %v1100
        %v1109 = vadd.f32 %v980, %v1101
        %v1110 = vadd.f32 %v981, %v1102
        %v1111 = vadd.f32 %v982, %v1103
        %v1112 = vadd.f32 %v983, %v1104
        %v1113 = vadd.f32 %v984, %v1105
        %1114 = vmatprep.subr.mxu0 0.0
        %1115 = vmatpush1.msra.mxu0 %v348
        %1116 = vmatprep.subr.mxu0 0.0
        %1117 = vmatpush1.msra.mxu0 %v349
        %1118 = vmatprep.subr.mxu0 0.0
        %1119 = vmatpush1.msra.mxu0 %v350
        %1120 = vmatprep.subr.mxu0 0.0
        %1121 = vmatpush1.msra.mxu0 %v351
        %1122 = vmatprep.subr.mxu0 0.0
        %1123 = vmatpush1.msra.mxu0 %v352
        %1124 = vmatprep.subr.mxu0 0.0
        %1125 = vmatpush1.msra.mxu0 %v353
        %1126 = vmatprep.subr.mxu0 0.0
        %1127 = vmatpush1.msra.mxu0 %v354
        %1128 = vmatprep.subr.mxu0 0.0
        %1129 = vmatpush1.msra.mxu0 %v355
        %1130 = vmatprep.subr.mxu0 0.0
        %1131 = vmatpush1.msra.mxu0 %v356
        %1132 = vmatprep.subr.mxu0 0.0
        %1133 = vmatpush1.msra.mxu0 %v357
        %1134 = vmatprep.subr.mxu0 0.0
        %1135 = vmatpush1.msra.mxu0 %v358
        %1136 = vmatprep.subr.mxu0 0.0
        %1137 = vmatpush1.msra.mxu0 %v359
        %1138 = vmatprep.subr.mxu0 0.0
        %1139 = vmatpush1.msra.mxu0 %v360
        %1140 = vmatprep.subr.mxu0 0.0
        %1141 = vmatpush1.msra.mxu0 %v361
        %1142 = vmatprep.subr.mxu0 0.0
        %1143 = vmatpush1.msra.mxu0 %v362
        %1144 = vmatprep.subr.mxu0 0.0
        %1145 = vmatpush1.msra.mxu0 %v363
        %1146 = vmatprep.subr.mxu0 0.0
        %1147 = vmatpush1.msra.mxu0 0.0
        %1148 = vmatprep.subr.mxu0 0.0
        %1149 = vmatpush1.msra.mxu0 0.0
        %1150 = vmatprep.subr.mxu0 0.0
        %1151 = vmatpush1.msra.mxu0 0.0
        %1152 = vmatprep.subr.mxu0 0.0
        %1153 = vmatpush1.msra.mxu0 0.0
        %1154 = vmatprep.subr.mxu0 0.0
        %1155 = vmatpush1.msra.mxu0 0.0
        %1156 = vmatprep.subr.mxu0 0.0
        %1157 = vmatpush1.msra.mxu0 0.0
        %1158 = vmatprep.subr.mxu0 0.0
        %1159 = vmatpush1.msra.mxu0 0.0
        %1160 = vmatprep.subr.mxu0 0.0
        %1161 = vmatpush1.msra.mxu0 0.0
        %1162 = vmatprep.subr.mxu0 0.0
        %1163 = vmatpush1.msra.mxu0 0.0
        %1164 = vmatprep.subr.mxu0 0.0
        %1165 = vmatpush1.msra.mxu0 0.0
        %1166 = vmatprep.subr.mxu0 0.0
        %1167 = vmatpush1.msra.mxu0 0.0
        %1168 = vmatprep.subr.mxu0 0.0
        %1169 = vmatpush1.msra.mxu0 0.0
        %1170 = vmatprep.subr.mxu0 0.0
        %1171 = vmatpush1.msra.mxu0 0.0
        %1172 = vmatprep.subr.mxu0 0.0
        %1173 = vmatpush1.msra.mxu0 0.0
        %1174 = vmatprep.subr.mxu0 0.0
        %1175 = vmatpush1.msra.mxu0 0.0
        %1176 = vmatprep.subr.mxu0 0.0
        %1177 = vmatpush1.msra.mxu0 0.0
        %1178 = vmatprep.mubr.f32.mxu0 0.0
        %1179 = vmatmul.mubr.f32.gmra.mrb[0].mxu0 %v1106
        %v1180 = vpop.f32.mrb[0].mxu0
        %v1181 = vadd.f32 %v854, %v1180
        %v1182 = vpop.f32.mrb[0].mxu0
        %1183 = vmatprep.mubr.f32.mxu0 0.0
        %1184 = vmatmul.mubr.f32.gmra.mrb[0].mxu0 %v1107
        %v1185 = vpop.f32.mrb[0].mxu0
        %v1186 = vadd.f32 %v854, %v1185
        %v1187 = vpop.f32.mrb[0].mxu0
        %1188 = vmatprep.mubr.f32.mxu0 0.0
        %1189 = vmatmul.mubr.f32.gmra.mrb[0].mxu0 %v1108
        %v1190 = vpop.f32.mrb[0].mxu0
        %v1191 = vadd.f32 %v854, %v1190
        %v1192 = vpop.f32.mrb[0].mxu0
        %1193 = vmatprep.mubr.f32.mxu0 0.0
        %1194 = vmatmul.mubr.f32.gmra.mrb[0].mxu0 %v1109
        %v1195 = vpop.f32.mrb[0].mxu0
        %v1196 = vadd.f32 %v854, %v1195
        %v1197 = vpop.f32.mrb[0].mxu0
        %1198 = vmatprep.mubr.f32.mxu0 0.0
        %1199 = vmatmul.mubr.f32.gmra.mrb[0].mxu0 %v1110
        %v1200 = vpop.f32.mrb[0].mxu0
        %v1201 = vadd.f32 %v854, %v1200
        %v1202 = vpop.f32.mrb[0].mxu0
        %1203 = vmatprep.mubr.f32.mxu0 0.0
        %1204 = vmatmul.mubr.f32.gmra.mrb[0].mxu0 %v1111
        %v1205 = vpop.f32.mrb[0].mxu0
        %v1206 = vadd.f32 %v854, %v1205
        %v1207 = vpop.f32.mrb[0].mxu0
        %1208 = vmatprep.mubr.f32.mxu0 0.0
        %1209 = vmatmul.mubr.f32.gmra.mrb[0].mxu0 %v1112
        %v1210 = vpop.f32.mrb[0].mxu0
        %v1211 = vadd.f32 %v854, %v1210
        %v1212 = vpop.f32.mrb[0].mxu0
        %1213 = vmatprep.mubr.f32.mxu0 0.0
        %1214 = vmatmul.mubr.f32.gmra.mrb[0].mxu0 %v1113
        %v1215 = vpop.f32.mrb[0].mxu0
        %v1216 = vadd.f32 %v854, %v1215
        %v1217 = vpop.f32.mrb[0].mxu0
        %1218 = vdwg.mxu0
        %v1219 = vtanh.pop %v1181
        %v1220 = vtanh.pop %v1186
        %v1221 = vtanh.pop %v1191
        %v1222 = vtanh.pop %v1196
        %v1223 = vtanh.pop %v1201
        %v1224 = vtanh.pop %v1206
        %v1225 = vtanh.pop %v1211
        %v1226 = vtanh.pop %v1216
        %v1227 = vmul.f32 %v1219, 0.25
        %v1228 = vmul.f32 %v1220, 0.25
        %v1229 = vmul.f32 %v1221, 0.25
        %v1230 = vmul.f32 %v1222, 0.25
        %v1231 = vmul.f32 %v1223, 0.25
        %v1232 = vmul.f32 %v1224, 0.25
        %v1233 = vmul.f32 %v1225, 0.25
        %v1234 = vmul.f32 %v1226, 0.25
        %v1235 = vadd.f32 %v1106, %v1227
        %v1236 = vadd.f32 %v1107, %v1228
        %v1237 = vadd.f32 %v1108, %v1229
        %v1238 = vadd.f32 %v1109, %v1230
        %v1239 = vadd.f32 %v1110, %v1231
        %v1240 = vadd.f32 %v1111, %v1232
        %v1241 = vadd.f32 %v1112, %v1233
        %v1242 = vadd.f32 %v1113, %v1234
        %1243 = vmatprep.subr.mxu0 0.0
        %1244 = vmatpush1.msra.mxu0 %v348
        %1245 = vmatprep.subr.mxu0 0.0
        %1246 = vmatpush1.msra.mxu0 %v349
        %1247 = vmatprep.subr.mxu0 0.0
        %1248 = vmatpush1.msra.mxu0 %v350
        %1249 = vmatprep.subr.mxu0 0.0
        %1250 = vmatpush1.msra.mxu0 %v351
        %1251 = vmatprep.subr.mxu0 0.0
        %1252 = vmatpush1.msra.mxu0 %v352
        %1253 = vmatprep.subr.mxu0 0.0
        %1254 = vmatpush1.msra.mxu0 %v353
        %1255 = vmatprep.subr.mxu0 0.0
        %1256 = vmatpush1.msra.mxu0 %v354
        %1257 = vmatprep.subr.mxu0 0.0
        %1258 = vmatpush1.msra.mxu0 %v355
        %1259 = vmatprep.subr.mxu0 0.0
        %1260 = vmatpush1.msra.mxu0 %v356
        %1261 = vmatprep.subr.mxu0 0.0
        %1262 = vmatpush1.msra.mxu0 %v357
        %1263 = vmatprep.subr.mxu0 0.0
        %1264 = vmatpush1.msra.mxu0 %v358
        %1265 = vmatprep.subr.mxu0 0.0
        %1266 = vmatpush1.msra.mxu0 %v359
        %1267 = vmatprep.subr.mxu0 0.0
        %1268 = vmatpush1.msra.mxu0 %v360
        %1269 = vmatprep.subr.mxu0 0.0
        %1270 = vmatpush1.msra.mxu0 %v361
        %1271 = vmatprep.subr.mxu0 0.0
        %1272 = vmatpush1.msra.mxu0 %v362
        %1273 = vmatprep.subr.mxu0 0.0
        %1274 = vmatpush1.msra.mxu0 %v363
        %1275 = vmatprep.subr.mxu0 0.0
        %1276 = vmatpush1.msra.mxu0 0.0
        %1277 = vmatprep.subr.mxu0 0.0
        %1278 = vmatpush1.msra.mxu0 0.0
        %1279 = vmatprep.subr.mxu0 0.0
        %1280 = vmatpush1.msra.mxu0 0.0
        %1281 = vmatprep.subr.mxu0 0.0
        %1282 = vmatpush1.msra.mxu0 0.0
        %1283 = vmatprep.subr.mxu0 0.0
        %1284 = vmatpush1.msra.mxu0 0.0
        %1285 = vmatprep.subr.mxu0 0.0
        %1286 = vmatpush1.msra.mxu0 0.0
        %1287 = vmatprep.subr.mxu0 0.0
        %1288 = vmatpush1.msra.mxu0 0.0
        %1289 = vmatprep.subr.mxu0 0.0
        %1290 = vmatpush1.msra.mxu0 0.0
        %1291 = vmatprep.subr.mxu0 0.0
        %1292 = vmatpush1.msra.mxu0 0.0
        %1293 = vmatprep.subr.mxu0 0.0
        %1294 = vmatpush1.msra.mxu0 0.0
        %1295 = vmatprep.subr.mxu0 0.0
        %1296 = vmatpush1.msra.mxu0 0.0
        %1297 = vmatprep.subr.mxu0 0.0
        %1298 = vmatpush1.msra.mxu0 0.0
        %1299 = vmatprep.subr.mxu0 0.0
        %1300 = vmatpush1.msra.mxu0 0.0
        %1301 = vmatprep.subr.mxu0 0.0
        %1302 = vmatpush1.msra.mxu0 0.0
        %1303 = vmatprep.subr.mxu0 0.0
        %1304 = vmatpush1.msra.mxu0 0.0
        %1305 = vmatprep.subr.mxu0 0.0
        %1306 = vmatpush1.msra.mxu0 0.0
        %1307 = vmatprep.mubr.f32.mxu0 0.0
        %1308 = vmatmul.mubr.f32.gmra.mrb[0].mxu0 %v1235
        %v1309 = vpop.f32.mrb[0].mxu0
        %v1310 = vadd.f32 %v854, %v1309
        %v1311 = vpop.f32.mrb[0].mxu0
        %1312 = vmatprep.mubr.f32.mxu0 0.0
        %1313 = vmatmul.mubr.f32.gmra.mrb[0].mxu0 %v1236
        %v1314 = vpop.f32.mrb[0].mxu0
        %v1315 = vadd.f32 %v854, %v1314
        %v1316 = vpop.f32.mrb[0].mxu0
        %1317 = vmatprep.mubr.f32.mxu0 0.0
        %1318 = vmatmul.mubr.f32.gmra.mrb[0].mxu0 %v1237
        %v1319 = vpop.f32.mrb[0].mxu0
        %v1320 = vadd.f32 %v854, %v1319
        %v1321 = vpop.f32.mrb[0].mxu0
        %1322 = vmatprep.mubr.f32.mxu0 0.0
        %1323 = vmatmul.mubr.f32.gmra.mrb[0].mxu0 %v1238
        %v1324 = vpop.f32.mrb[0].mxu0
        %v1325 = vadd.f32 %v854, %v1324
        %v1326 = vpop.f32.mrb[0].mxu0
        %1327 = vmatprep.mubr.f32.mxu0 0.0
        %1328 = vmatmul.mubr.f32.gmra.mrb[0].mxu0 %v1239
        %v1329 = vpop.f32.mrb[0].mxu0
        %v1330 = vadd.f32 %v854, %v1329
        %v1331 = vpop.f32.mrb[0].mxu0
        %1332 = vmatprep.mubr.f32.mxu0 0.0
        %1333 = vmatmul.mubr.f32.gmra.mrb[0].mxu0 %v1240
        %v1334 = vpop.f32.mrb[0].mxu0
        %v1335 = vadd.f32 %v854, %v1334
        %v1336 = vpop.f32.mrb[0].mxu0
        %1337 = vmatprep.mubr.f32.mxu0 0.0
        %1338 = vmatmul.mubr.f32.gmra.mrb[0].mxu0 %v1241
        %v1339 = vpop.f32.mrb[0].mxu0
        %v1340 = vadd.f32 %v854, %v1339
        %v1341 = vpop.f32.mrb[0].mxu0
        %1342 = vmatprep.mubr.f32.mxu0 0.0
        %1343 = vmatmul.mubr.f32.gmra.mrb[0].mxu0 %v1242
        %v1344 = vpop.f32.mrb[0].mxu0
        %v1345 = vadd.f32 %v854, %v1344
        %v1346 = vpop.f32.mrb[0].mxu0
        %1347 = vdwg.mxu0
        %v1348 = vtanh.pop %v1310
        %v1349 = vtanh.pop %v1315
        %v1350 = vtanh.pop %v1320
        %v1351 = vtanh.pop %v1325
        %v1352 = vtanh.pop %v1330
        %v1353 = vtanh.pop %v1335
        %v1354 = vtanh.pop %v1340
        %v1355 = vtanh.pop %v1345
        %v1356 = vmul.f32 %v1348, 0.25
        %v1357 = vmul.f32 %v1349, 0.25
        %v1358 = vmul.f32 %v1350, 0.25
        %v1359 = vmul.f32 %v1351, 0.25
        %v1360 = vmul.f32 %v1352, 0.25
        %v1361 = vmul.f32 %v1353, 0.25
        %v1362 = vmul.f32 %v1354, 0.25
        %v1363 = vmul.f32 %v1355, 0.25
        %v1364 = vadd.f32 %v1235, %v1356
        %v1365 = vadd.f32 %v1236, %v1357
        %v1366 = vadd.f32 %v1237, %v1358
        %v1367 = vadd.f32 %v1238, %v1359
        %v1368 = vadd.f32 %v1239, %v1360
        %v1369 = vadd.f32 %v1240, %v1361
        %v1370 = vadd.f32 %v1241, %v1362
        %v1371 = vadd.f32 %v1242, %v1363
        %1372 = vmatprep.subr.mxu0 0.0
        %1373 = vmatpush1.xpose.msra.mxu0 %v1364
        %1374 = vmatprep.subr.mxu0 0.0
        %1375 = vmatpush1.xpose.msra.mxu0 %v1365
        %1376 = vmatprep.subr.mxu0 0.0
        %1377 = vmatpush1.xpose.msra.mxu0 0.0
        %1378 = vmatprep.subr.mxu0 0.0
        %1379 = vmatpush1.xpose.msra.mxu0 0.0
        %1380 = vmatprep.subr.mxu0 0.0
        %1381 = vmatpush1.xpose.msra.mxu0 0.0
        %1382 = vmatprep.subr.mxu0 0.0
        %1383 = vmatpush1.xpose.msra.mxu0 0.0
        %1384 = vmatprep.subr.mxu0 0.0
        %1385 = vmatpush1.xpose.msra.mxu0 0.0
        %1386 = vmatprep.subr.mxu0 0.0
        %1387 = vmatpush1.xpose.msra.mxu0 0.0
        %1388 = vmatprep.subr.mxu0 0.0
        %1389 = vmatpush1.xpose.msra.mxu0 0.0
        %1390 = vmatprep.subr.mxu0 0.0
        %1391 = vmatpush1.xpose.msra.mxu0 0.0
        %1392 = vmatprep.subr.mxu0 0.0
        %1393 = vmatpush1.xpose.msra.mxu0 0.0
        %1394 = vmatprep.subr.mxu0 0.0
        %1395 = vmatpush1.xpose.msra.mxu0 0.0
        %1396 = vmatprep.subr.mxu0 0.0
        %1397 = vmatpush1.xpose.msra.mxu0 0.0
        %1398 = vmatprep.subr.mxu0 0.0
        %1399 = vmatpush1.xpose.msra.mxu0 0.0
        %1400 = vmatprep.subr.mxu0 0.0
        %1401 = vmatpush1.xpose.msra.mxu0 0.0
        %1402 = vmatprep.subr.mxu0 0.0
        %1403 = vmatpush1.xpose.msra.mxu0 0.0
        %1404 = vmatprep.subr.mxu0 0.0
        %1405 = vmatpush1.xpose.msra.mxu0 0.0
        %1406 = vmatprep.subr.mxu0 0.0
        %1407 = vmatpush1.xpose.msra.mxu0 0.0
        %1408 = vmatprep.subr.mxu0 0.0
        %1409 = vmatpush1.xpose.msra.mxu0 0.0
        %1410 = vmatprep.subr.mxu0 0.0
        %1411 = vmatpush1.xpose.msra.mxu0 0.0
        %1412 = vmatprep.subr.mxu0 0.0
        %1413 = vmatpush1.xpose.msra.mxu0 0.0
        %1414 = vmatprep.subr.mxu0 0.0
        %1415 = vmatpush1.xpose.msra.mxu0 0.0
        %1416 = vmatprep.subr.mxu0 0.0
        %1417 = vmatpush1.xpose.msra.mxu0 0.0
        %1418 = vmatprep.subr.mxu0 0.0
        %1419 = vmatpush1.xpose.msra.mxu0 0.0
        %1420 = vmatprep.subr.mxu0 0.0
        %1421 = vmatpush1.xpose.msra.mxu0 0.0
        %1422 = vmatprep.subr.mxu0 0.0
        %1423 = vmatpush1.xpose.msra.mxu0 0.0
        %1424 = vmatprep.subr.mxu0 0.0
        %1425 = vmatpush1.xpose.msra.mxu0 0.0
        %1426 = vmatprep.subr.mxu0 0.0
        %1427 = vmatpush1.xpose.msra.mxu0 0.0
        %1428 = vmatprep.subr.mxu0 0.0
        %1429 = vmatpush1.xpose.msra.mxu0 0.0
        %1430 = vmatprep.subr.mxu0 0.0
        %1431 = vmatpush1.xpose.msra.mxu0 0.0
        %1432 = vmatprep.subr.mxu0 0.0
        %1433 = vmatpush1.xpose.msra.mxu0 0.0
        %1434 = vmatprep.subr.mxu0 0.0
        %1435 = vmatpush1.xpose.msra.mxu0 0.0
        %1436 = vmatprep.mubr.f32.mxu0 0.0
        %1437 = vmatmul.mubr.f32.gmra.mrb[0].mxu0 %v1364
        %v1438 = vpop.f32.mrb[0].mxu0
        %v1439 = vadd.f32 0.0, %v1438
        %v1440 = vpop.f32.mrb[0].mxu0
        %1441 = vmatprep.mubr.f32.mxu0 0.0
        %1442 = vmatmul.mubr.f32.gmra.mrb[0].mxu0 %v1365
        %v1443 = vpop.f32.mrb[0].mxu0
        %v1444 = vadd.f32 0.0, %v1443
        %v1445 = vpop.f32.mrb[0].mxu0
        %1446 = vdwg.mxu0
        %1447 = vmatprep.subr.mxu0 0.0
        %1448 = vmatpush1.xpose.msra.mxu0 %v1366
        %1449 = vmatprep.subr.mxu0 0.0
        %1450 = vmatpush1.xpose.msra.mxu0 %v1367
        %1451 = vmatprep.subr.mxu0 0.0
        %1452 = vmatpush1.xpose.msra.mxu0 0.0
        %1453 = vmatprep.subr.mxu0 0.0
        %1454 = vmatpush1.xpose.msra.mxu0 0.0
        %1455 = vmatprep.subr.mxu0 0.0
        %1456 = vmatpush1.xpose.msra.mxu0 0.0
        %1457 = vmatprep.subr.mxu0 0.0
        %1458 = vmatpush1.xpose.msra.mxu0 0.0
        %1459 = vmatprep.subr.mxu0 0.0
        %1460 = vmatpush1.xpose.msra.mxu0 0.0
        %1461 = vmatprep.subr.mxu0 0.0
        %1462 = vmatpush1.xpose.msra.mxu0 0.0
        %1463 = vmatprep.subr.mxu0 0.0
        %1464 = vmatpush1.xpose.msra.mxu0 0.0
        %1465 = vmatprep.subr.mxu0 0.0
        %1466 = vmatpush1.xpose.msra.mxu0 0.0
        %1467 = vmatprep.subr.mxu0 0.0
        %1468 = vmatpush1.xpose.msra.mxu0 0.0
        %1469 = vmatprep.subr.mxu0 0.0
        %1470 = vmatpush1.xpose.msra.mxu0 0.0
        %1471 = vmatprep.subr.mxu0 0.0
        %1472 = vmatpush1.xpose.msra.mxu0 0.0
        %1473 = vmatprep.subr.mxu0 0.0
        %1474 = vmatpush1.xpose.msra.mxu0 0.0
        %1475 = vmatprep.subr.mxu0 0.0
        %1476 = vmatpush1.xpose.msra.mxu0 0.0
        %1477 = vmatprep.subr.mxu0 0.0
        %1478 = vmatpush1.xpose.msra.mxu0 0.0
        %1479 = vmatprep.subr.mxu0 0.0
        %1480 = vmatpush1.xpose.msra.mxu0 0.0
        %1481 = vmatprep.subr.mxu0 0.0
        %1482 = vmatpush1.xpose.msra.mxu0 0.0
        %1483 = vmatprep.subr.mxu0 0.0
        %1484 = vmatpush1.xpose.msra.mxu0 0.0
        %1485 = vmatprep.subr.mxu0 0.0
        %1486 = vmatpush1.xpose.msra.mxu0 0.0
        %1487 = vmatprep.subr.mxu0 0.0
        %1488 = vmatpush1.xpose.msra.mxu0 0.0
        %1489 = vmatprep.subr.mxu0 0.0
        %1490 = vmatpush1.xpose.msra.mxu0 0.0
        %1491 = vmatprep.subr.mxu0 0.0
        %1492 = vmatpush1.xpose.msra.mxu0 0.0
        %1493 = vmatprep.subr.mxu0 0.0
        %1494 = vmatpush1.xpose.msra.mxu0 0.0
        %1495 = vmatprep.subr.mxu0 0.0
        %1496 = vmatpush1.xpose.msra.mxu0 0.0
        %1497 = vmatprep.subr.mxu0 0.0
        %1498 = vmatpush1.xpose.msra.mxu0 0.0
        %1499 = vmatprep.subr.mxu0 0.0
        %1500 = vmatpush1.xpose.msra.mxu0 0.0
        %1501 = vmatprep.subr.mxu0 0.0
        %1502 = vmatpush1.xpose.msra.mxu0 0.0
        %1503 = vmatprep.subr.mxu0 0.0
        %1504 = vmatpush1.xpose.msra.mxu0 0.0
        %1505 = vmatprep.subr.mxu0 0.0
        %1506 = vmatpush1.xpose.msra.mxu0 0.0
        %1507 = vmatprep.subr.mxu0 0.0
        %1508 = vmatpush1.xpose.msra.mxu0 0.0
        %1509 = vmatprep.subr.mxu0 0.0
        %1510 = vmatpush1.xpose.msra.mxu0 0.0
        %1511 = vmatprep.mubr.f32.mxu0 0.0
        %1512 = vmatmul.mubr.f32.gmra.mrb[0].mxu0 %v1366
        %v1513 = vpop.f32.mrb[0].mxu0
        %v1514 = vadd.f32 0.0, %v1513
        %v1515 = vpop.f32.mrb[0].mxu0
        %1516 = vmatprep.mubr.f32.mxu0 0.0
        %1517 = vmatmul.mubr.f32.gmra.mrb[0].mxu0 %v1367
        %v1518 = vpop.f32.mrb[0].mxu0
        %v1519 = vadd.f32 0.0, %v1518
        %v1520 = vpop.f32.mrb[0].mxu0
        %1521 = vdwg.mxu0
        %1522 = vmatprep.subr.mxu0 0.0
        %1523 = vmatpush1.xpose.msra.mxu0 %v1368
        %1524 = vmatprep.subr.mxu0 0.0
        %1525 = vmatpush1.xpose.msra.mxu0 %v1369
        %1526 = vmatprep.subr.mxu0 0.0
        %1527 = vmatpush1.xpose.msra.mxu0 0.0
        %1528 = vmatprep.subr.mxu0 0.0
        %1529 = vmatpush1.xpose.msra.mxu0 0.0
        %1530 = vmatprep.subr.mxu0 0.0
        %1531 = vmatpush1.xpose.msra.mxu0 0.0
        %1532 = vmatprep.subr.mxu0 0.0
        %1533 = vmatpush1.xpose.msra.mxu0 0.0
        %1534 = vmatprep.subr.mxu0 0.0
        %1535 = vmatpush1.xpose.msra.mxu0 0.0
        %1536 = vmatprep.subr.mxu0 0.0
        %1537 = vmatpush1.xpose.msra.mxu0 0.0
        %1538 = vmatprep.subr.mxu0 0.0
        %1539 = vmatpush1.xpose.msra.mxu0 0.0
        %1540 = vmatprep.subr.mxu0 0.0
        %1541 = vmatpush1.xpose.msra.mxu0 0.0
        %1542 = vmatprep.subr.mxu0 0.0
        %1543 = vmatpush1.xpose.msra.mxu0 0.0
        %1544 = vmatprep.subr.mxu0 0.0
        %1545 = vmatpush1.xpose.msra.mxu0 0.0
        %1546 = vmatprep.subr.mxu0 0.0
        %1547 = vmatpush1.xpose.msra.mxu0 0.0
        %1548 = vmatprep.subr.mxu0 0.0
        %1549 = vmatpush1.xpose.msra.mxu0 0.0
        %1550 = vmatprep.subr.mxu0 0.0
        %1551 = vmatpush1.xpose.msra.mxu0 0.0
        %1552 = vmatprep.subr.mxu0 0.0
        %1553 = vmatpush1.xpose.msra.mxu0 0.0
        %1554 = vmatprep.subr.mxu0 0.0
        %1555 = vmatpush1.xpose.msra.mxu0 0.0
        %1556 = vmatprep.subr.mxu0 0.0
        %1557 = vmatpush1.xpose.msra.mxu0 0.0
        %1558 = vmatprep.subr.mxu0 0.0
        %1559 = vmatpush1.xpose.msra.mxu0 0.0
        %1560 = vmatprep.subr.mxu0 0.0
        %1561 = vmatpush1.xpose.msra.mxu0 0.0
        %1562 = vmatprep.subr.mxu0 0.0
        %1563 = vmatpush1.xpose.msra.mxu0 0.0
        %1564 = vmatprep.subr.mxu0 0.0
        %1565 = vmatpush1.xpose.msra.mxu0 0.0
        %1566 = vmatprep.subr.mxu0 0.0
        %1567 = vmatpush1.xpose.msra.mxu0 0.0
        %1568 = vmatprep.subr.mxu0 0.0
        %1569 = vmatpush1.xpose.msra.mxu0 0.0
        %1570 = vmatprep.subr.mxu0 0.0
        %1571 = vmatpush1.xpose.msra.mxu0 0.0
        %1572 = vmatprep.subr.mxu0 0.0
        %1573 = vmatpush1.xpose.msra.mxu0 0.0
        %1574 = vmatprep.subr.mxu0 0.0
        %1575 = vmatpush1.xpose.msra.mxu0 0.0
        %1576 = vmatprep.subr.mxu0 0.0
        %1577 = vmatpush1.xpose.msra.mxu0 0.0
        %1578 = vmatprep.subr.mxu0 0.0
        %1579 = vmatpush1.xpose.msra.mxu0 0.0
        %1580 = vmatprep.subr.mxu0 0.0
        %1581 = vmatpush1.xpose.msra.mxu0 0.0
        %1582 = vmatprep.subr.mxu0 0.0
        %1583 = vmatpush1.xpose.msra.mxu0 0.0
        %1584 = vmatprep.subr.mxu0 0.0
        %1585 = vmatpush1.xpose.msra.mxu0 0.0
        %1586 = vmatprep.mubr.f32.mxu0 0.0
        %1587 = vmatmul.mubr.f32.gmra.mrb[0].mxu0 %v1368
        %v1588 = vpop.f32.mrb[0].mxu0
        %v1589 = vadd.f32 0.0, %v1588
        %v1590 = vpop.f32.mrb[0].mxu0
        %1591 = vmatprep.mubr.f32.mxu0 0.0
        %1592 = vmatmul.mubr.f32.gmra.mrb[0].mxu0 %v1369
        %v1593 = vpop.f32.mrb[0].mxu0
        %v1594 = vadd.f32 0.0, %v1593
        %v1595 = vpop.f32.mrb[0].mxu0
        %1596 = vdwg.mxu0
        %1597 = vmatprep.subr.mxu0 0.0
        %1598 = vmatpush1.xpose.msra.mxu0 %v1370
        %1599 = vmatprep.subr.mxu0 0.0
        %1600 = vmatpush1.xpose.msra.mxu0 %v1371
        %1601 = vmatprep.subr.mxu0 0.0
        %1602 = vmatpush1.xpose.msra.mxu0 0.0
        %1603 = vmatprep.subr.mxu0 0.0
        %1604 = vmatpush1.xpose.msra.mxu0 0.0
        %1605 = vmatprep.subr.mxu0 0.0
        %1606 = vmatpush1.xpose.msra.mxu0 0.0
        %1607 = vmatprep.subr.mxu0 0.0
        %1608 = vmatpush1.xpose.msra.mxu0 0.0
        %1609 = vmatprep.subr.mxu0 0.0
        %1610 = vmatpush1.xpose.msra.mxu0 0.0
        %1611 = vmatprep.subr.mxu0 0.0
        %1612 = vmatpush1.xpose.msra.mxu0 0.0
        %1613 = vmatprep.subr.mxu0 0.0
        %1614 = vmatpush1.xpose.msra.mxu0 0.0
        %1615 = vmatprep.subr.mxu0 0.0
        %1616 = vmatpush1.xpose.msra.mxu0 0.0
        %1617 = vmatprep.subr.mxu0 0.0
        %1618 = vmatpush1.xpose.msra.mxu0 0.0
        %1619 = vmatprep.subr.mxu0 0.0
        %1620 = vmatpush1.xpose.msra.mxu0 0.0
        %1621 = vmatprep.subr.mxu0 0.0
        %1622 = vmatpush1.xpose.msra.mxu0 0.0
        %1623 = vmatprep.subr.mxu0 0.0
        %1624 = vmatpush1.xpose.msra.mxu0 0.0
        %1625 = vmatprep.subr.mxu0 0.0
        %1626 = vmatpush1.xpose.msra.mxu0 0.0
        %1627 = vmatprep.subr.mxu0 0.0
        %1628 = vmatpush1.xpose.msra.mxu0 0.0
        %1629 = vmatprep.subr.mxu0 0.0
        %1630 = vmatpush1.xpose.msra.mxu0 0.0
        %1631 = vmatprep.subr.mxu0 0.0
        %1632 = vmatpush1.xpose.msra.mxu0 0.0
        %1633 = vmatprep.subr.mxu0 0.0
        %1634 = vmatpush1.xpose.msra.mxu0 0.0
        %1635 = vmatprep.subr.mxu0 0.0
        %1636 = vmatpush1.xpose.msra.mxu0 0.0
        %1637 = vmatprep.subr.mxu0 0.0
        %1638 = vmatpush1.xpose.msra.mxu0 0.0
        %1639 = vmatprep.subr.mxu0 0.0
        %1640 = vmatpush1.xpose.msra.mxu0 0.0
        %1641 = vmatprep.subr.mxu0 0.0
        %1642 = vmatpush1.xpose.msra.mxu0 0.0
        %1643 = vmatprep.subr.mxu0 0.0
        %1644 = vmatpush1.xpose.msra.mxu0 0.0
        %1645 = vmatprep.subr.mxu0 0.0
        %1646 = vmatpush1.xpose.msra.mxu0 0.0
        %1647 = vmatprep.subr.mxu0 0.0
        %1648 = vmatpush1.xpose.msra.mxu0 0.0
        %1649 = vmatprep.subr.mxu0 0.0
        %1650 = vmatpush1.xpose.msra.mxu0 0.0
        %1651 = vmatprep.subr.mxu0 0.0
        %1652 = vmatpush1.xpose.msra.mxu0 0.0
        %1653 = vmatprep.subr.mxu0 0.0
        %1654 = vmatpush1.xpose.msra.mxu0 0.0
        %1655 = vmatprep.subr.mxu0 0.0
        %1656 = vmatpush1.xpose.msra.mxu0 0.0
        %1657 = vmatprep.subr.mxu0 0.0
        %1658 = vmatpush1.xpose.msra.mxu0 0.0
        %1659 = vmatprep.subr.mxu0 0.0
        %1660 = vmatpush1.xpose.msra.mxu0 0.0
        %1661 = vmatprep.mubr.f32.mxu0 0.0
        %1662 = vmatmul.mubr.f32.gmra.mrb[0].mxu0 %v1370
        %v1663 = vpop.f32.mrb[0].mxu0
        %v1664 = vadd.f32 0.0, %v1663
        %v1665 = vpop.f32.mrb[0].mxu0
        %1666 = vmatprep.mubr.f32.mxu0 0.0
        %1667 = vmatmul.mubr.f32.gmra.mrb[0].mxu0 %v1371
        %v1668 = vpop.f32.mrb[0].mxu0
        %v1669 = vadd.f32 0.0, %v1668
        %v1670 = vpop.f32.mrb[0].mxu0
        %1671 = vdwg.mxu0
        %v1672 = vxor.u32 %v1439, 2147483648
        %v1673 = vxor.u32 %v1444, 2147483648
        %v1674 = vxor.u32 %v1514, 2147483648
        %v1675 = vxor.u32 %v1519, 2147483648
        %v1676 = vxor.u32 %v1589, 2147483648
        %v1677 = vxor.u32 %v1594, 2147483648
        %v1678 = vxor.u32 %v1664, 2147483648
        %v1679 = vxor.u32 %v1669, 2147483648
        %v1680 = vmul.f32 %v1672, 1.442695
        %v1681 = vpow.pop %v1680
        %v1682 = vmul.f32 %v1673, 1.442695
        %v1683 = vpow.pop %v1682
        %v1684 = vmul.f32 %v1674, 1.442695
        %v1685 = vpow.pop %v1684
        %v1686 = vmul.f32 %v1675, 1.442695
        %v1687 = vpow.pop %v1686
        %v1688 = vmul.f32 %v1676, 1.442695
        %v1689 = vpow.pop %v1688
        %v1690 = vmul.f32 %v1677, 1.442695
        %v1691 = vpow.pop %v1690
        %v1692 = vmul.f32 %v1678, 1.442695
        %v1693 = vpow.pop %v1692
        %v1694 = vmul.f32 %v1679, 1.442695
        %v1695 = vpow.pop %v1694
        %v1696 = vadd.f32 %v1681, 1.0
        %v1697 = vadd.f32 %v1683, 1.0
        %v1698 = vadd.f32 %v1685, 1.0
        %v1699 = vadd.f32 %v1687, 1.0
        %v1700 = vadd.f32 %v1689, 1.0
        %v1701 = vadd.f32 %v1691, 1.0
        %v1702 = vadd.f32 %v1693, 1.0
        %v1703 = vadd.f32 %v1695, 1.0
        %v1704 = vrcp.pop %v1696
        %v1705 = vmul.f32 1.0, %v1704
        %v1706 = vrcp.pop %v1697
        %v1707 = vmul.f32 1.0, %v1706
        %v1708 = vrcp.pop %v1698
        %v1709 = vmul.f32 1.0, %v1708
        %v1710 = vrcp.pop %v1699
        %v1711 = vmul.f32 1.0, %v1710
        %v1712 = vrcp.pop %v1700
        %v1713 = vmul.f32 1.0, %v1712
        %v1714 = vrcp.pop %v1701
        %v1715 = vmul.f32 1.0, %v1714
        %v1716 = vrcp.pop %v1702
        %v1717 = vmul.f32 1.0, %v1716
        %v1718 = vrcp.pop %v1703
        %v1719 = vmul.f32 1.0, %v1718
        %v1720 = vcombine.low %v1705, %v1713
        %v1721 = vcombine.high %v1705, %v1713
        %v1723 = vunpack.c.l.s4 1983009808
        %v1724 = vunpack.c.0.s8 %v1723
        %v1725 = vlaneseq
        %v1726 = vshrl.u32 %v1725, 7
        %v1727 = vsub.s32 %v1724, %v1726
        %v1728 = vrot.slane %v1720, %v1727
        %v1730 = vunpack.c.l.s4 1983009808
        %v1731 = vunpack.c.0.s8 %v1730
        %v1732 = vlaneseq
        %v1733 = vshrl.u32 %v1732, 7
        %v1734 = vsub.s32 %v1731, %v1733
        %v1735 = vrot.slane %v1721, %v1734
        %v1736 = vcombine.low %v1709, %v1717
        %v1737 = vcombine.high %v1709, %v1717
        %v1739 = vunpack.c.l.s4 1983009808
        %v1740 = vunpack.c.0.s8 %v1739
        %v1741 = vlaneseq
        %v1742 = vshrl.u32 %v1741, 7
        %v1743 = vsub.s32 %v1740, %v1742
        %v1744 = vrot.slane %v1736, %v1743
        %v1746 = vunpack.c.l.s4 1983009808
        %v1747 = vunpack.c.0.s8 %v1746
        %v1748 = vlaneseq
        %v1749 = vshrl.u32 %v1748, 7
        %v1750 = vsub.s32 %v1747, %v1749
        %v1751 = vrot.slane %v1737, %v1750
        %v1752 = vcombine.low %v1728, %v1744
        %v1753 = vcombine.high %v1728, %v1744
        %v1755 = vunpack.c.l.s4 1934713408
        %v1756 = vunpack.c.0.s8 %v1755
        %v1757 = vlaneseq
        %v1758 = vshrl.u32 %v1757, 7
        %v1759 = vsub.s32 %v1756, %v1758
        %v1760 = vrot.slane %v1752, %v1759
        %v1762 = vunpack.c.l.s4 1934713408
        %v1763 = vunpack.c.0.s8 %v1762
        %v1764 = vlaneseq
        %v1765 = vshrl.u32 %v1764, 7
        %v1766 = vsub.s32 %v1763, %v1765
        %v1767 = vrot.slane %v1753, %v1766
        %v1768 = vcombine.low %v1735, %v1751
        %v1769 = vcombine.high %v1735, %v1751
        %v1771 = vunpack.c.l.s4 1934713408
        %v1772 = vunpack.c.0.s8 %v1771
        %v1773 = vlaneseq
        %v1774 = vshrl.u32 %v1773, 7
        %v1775 = vsub.s32 %v1772, %v1774
        %v1776 = vrot.slane %v1768, %v1775
        %v1778 = vunpack.c.l.s4 1934713408
        %v1779 = vunpack.c.0.s8 %v1778
        %v1780 = vlaneseq
        %v1781 = vshrl.u32 %v1780, 7
        %v1782 = vsub.s32 %v1779, %v1781
        %v1783 = vrot.slane %v1769, %v1782
        %v1784 = vcombine.high %v1760, 0.0
        %v1785 = vcombine.high %v1767, 0.0
        %v1786 = vcombine.high %v1776, 0.0
        %v1787 = vcombine.high %v1783, 0.0
        %v1788 = vcombine.low %v1707, %v1715
        %v1789 = vcombine.high %v1707, %v1715
        %v1791 = vunpack.c.l.s4 1983009808
        %v1792 = vunpack.c.0.s8 %v1791
        %v1793 = vlaneseq
        %v1794 = vshrl.u32 %v1793, 7
        %v1795 = vsub.s32 %v1792, %v1794
        %v1796 = vrot.slane %v1788, %v1795
        %v1798 = vunpack.c.l.s4 1983009808
        %v1799 = vunpack.c.0.s8 %v1798
        %v1800 = vlaneseq
        %v1801 = vshrl.u32 %v1800, 7
        %v1802 = vsub.s32 %v1799, %v1801
        %v1803 = vrot.slane %v1789, %v1802
        %v1804 = vcombine.low %v1711, %v1719
        %v1805 = vcombine.high %v1711, %v1719
        %v1807 = vunpack.c.l.s4 1983009808
        %v1808 = vunpack.c.0.s8 %v1807
        %v1809 = vlaneseq
        %v1810 = vshrl.u32 %v1809, 7
        %v1811 = vsub.s32 %v1808, %v1810
        %v1812 = vrot.slane %v1804, %v1811
        %v1814 = vunpack.c.l.s4 1983009808
        %v1815 = vunpack.c.0.s8 %v1814
        %v1816 = vlaneseq
        %v1817 = vshrl.u32 %v1816, 7
        %v1818 = vsub.s32 %v1815, %v1817
        %v1819 = vrot.slane %v1805, %v1818
        %v1820 = vcombine.low %v1796, %v1812
        %v1821 = vcombine.high %v1796, %v1812
        %v1823 = vunpack.c.l.s4 1934713408
        %v1824 = vunpack.c.0.s8 %v1823
        %v1825 = vlaneseq
        %v1826 = vshrl.u32 %v1825, 7
        %v1827 = vsub.s32 %v1824, %v1826
        %v1828 = vrot.slane %v1820, %v1827
        %v1830 = vunpack.c.l.s4 1934713408
        %v1831 = vunpack.c.0.s8 %v1830
        %v1832 = vlaneseq
        %v1833 = vshrl.u32 %v1832, 7
        %v1834 = vsub.s32 %v1831, %v1833
        %v1835 = vrot.slane %v1821, %v1834
        %v1836 = vcombine.low %v1803, %v1819
        %v1837 = vcombine.high %v1803, %v1819
        %v1839 = vunpack.c.l.s4 1934713408
        %v1840 = vunpack.c.0.s8 %v1839
        %v1841 = vlaneseq
        %v1842 = vshrl.u32 %v1841, 7
        %v1843 = vsub.s32 %v1840, %v1842
        %v1844 = vrot.slane %v1836, %v1843
        %v1846 = vunpack.c.l.s4 1934713408
        %v1847 = vunpack.c.0.s8 %v1846
        %v1848 = vlaneseq
        %v1849 = vshrl.u32 %v1848, 7
        %v1850 = vsub.s32 %v1847, %v1849
        %v1851 = vrot.slane %v1837, %v1850
        %v1852 = vcombine.high %v1828, 0.0
        %v1853 = vcombine.high %v1835, 0.0
        %v1854 = vcombine.high %v1844, 0.0
        %v1855 = vcombine.high %v1851, 0.0
        %1857 = vrot.lane.b32.xlu0 %v1784, 16
        %v1858 = vpop.permute.xlu0 %1857
        %1861 = vrot.lane.b32.xlu0 %v1767, 32
        %v1862 = vpop.permute.xlu0 %1861
        %1865 = vrot.lane.b32.xlu0 %v1785, 48
        %v1866 = vpop.permute.xlu0 %1865
        %1869 = vrot.lane.b32.xlu0 %v1776, 64
        %v1870 = vpop.permute.xlu0 %1869
        %1873 = vrot.lane.b32.xlu0 %v1786, 80
        %v1874 = vpop.permute.xlu0 %1873
        %1877 = vrot.lane.b32.xlu0 %v1783, 96
        %v1878 = vpop.permute.xlu0 %1877
        %1881 = vrot.lane.b32.xlu0 %v1787, 112
        %v1882 = vpop.permute.xlu0 %1881
        %1885 = vrot.lane.b32.xlu0 %v1852, 16
        %v1886 = vpop.permute.xlu0 %1885
        %1889 = vrot.lane.b32.xlu0 %v1835, 32
        %v1890 = vpop.permute.xlu0 %1889
        %1893 = vrot.lane.b32.xlu0 %v1853, 48
        %v1894 = vpop.permute.xlu0 %1893
        %1897 = vrot.lane.b32.xlu0 %v1844, 64
        %v1898 = vpop.permute.xlu0 %1897
        %1901 = vrot.lane.b32.xlu0 %v1854, 80
        %v1902 = vpop.permute.xlu0 %1901
        %1905 = vrot.lane.b32.xlu0 %v1851, 96
        %v1906 = vpop.permute.xlu0 %1905
        %1909 = vrot.lane.b32.xlu0 %v1855, 112
        %v1910 = vpop.permute.xlu0 %1909
        %v1912 = vsel %vm517, %v1760, %v1858
        %v1913 = vsel %vm379, %v1912, %v1862
        %vm1914 = vcmask 392192
        %v1915 = vsel %vm1914, %v1913, %v1866
        %vm1916 = vcmask 523264
        %v1917 = vsel %vm1916, %v1915, %v1870
        %vm1918 = vcmask 654336
        %v1919 = vsel %vm1918, %v1917, %v1874
        %vm1920 = vcmask 785408
        %v1921 = vsel %vm1920, %v1919, %v1878
        %vm1922 = vcmask 916480
        %v1923 = vsel %vm1922, %v1921, %v1882
        %v1924 = vsel %vm517, %v1828, %v1886
        %v1925 = vsel %vm379, %v1924, %v1890
        %v1926 = vsel %vm1914, %v1925, %v1894
        %v1927 = vsel %vm1916, %v1926, %v1898
        %v1928 = vsel %vm1918, %v1927, %v1902
        %v1929 = vsel %vm1920, %v1928, %v1906
        %v1930 = vsel %vm1922, %v1929, %v1910
        %v1933 = vcombine.low %v1923, %v1930
        %1935 = vst [vmem:[%s340] sm:$0xff] %v1933
        %s1936 = sand.u32 %s171, 1
        %s1937 = scalar_lea.sflag [#allocation4], %s1936
        %s1938 = sand.u32 %s171, 1
        %s1939 = smul.addr %s1938, 8
        %s1940 = scalar_lea.vmem [#allocation10], %s1939
        // Predicated region
        $region61: #{tpu_custom_call.1} parent=43 // pred_check
          %p1941 = pneg %p181
        $region62: #{tpu_custom_call.1} parent=43 // pred_check_branch
          %1943 = sbr.rel (%p1941) target = $region64
        $region63: #{tpu_custom_call.1} parent=43 // pred_region
          %s1945 = ssub.s32 128, 128
          %1946 = vsyncadd %s1937, %s1945
          %s1947 = smul.addr %s27, 2
          %s1948 = smul.addr %s1947, 64
          %s1949 = scalar_lea.hbm %s6, %s1948
          %s1951 = sshll.u32 %s1940, 4
          %s1952 = int_to_ptr.vmem [resolvable:$true] %s1951
          %1954 = dma.vmem_to_hbm [thread:$0]  %s1952, 128, %s1949, %s1937
        $region64: #{tpu_custom_call.1} parent=43 // pred_fallthru
          _
      $region44: #{tpu_custom_call.1} parent=5 // pred_fallthru
        _
      %p1955 = scmp.le.s32.totalorder 2, %s22
      // Predicated region
      $region65: #{tpu_custom_call.1} parent=5 // pred_check
        %p1956 = pneg %p1955
      $region66: #{tpu_custom_call.1} parent=5 // pred_check_branch
        %1958 = sbr.rel (%p1956) target = $region68
      $region67: #{tpu_custom_call.1} parent=5 // pred_region
        %s1959 = ssub.s32 %s22, 2
        // Predicated region
        $region69: #{tpu_custom_call.1} parent=67 // pred_check
          %p1960 = pneg %p187
        $region70: #{tpu_custom_call.1} parent=67 // pred_check_branch
          %1962 = sbr.rel (%p1960) target = $region72
        $region71: #{tpu_custom_call.1} parent=67 // pred_region
          %s1963 = sand.u32 %s172, 1
          %s1964 = scalar_lea.sflag [#allocation4], %s1963
          %s1965 = sand.u32 %s172, 1
          %s1966 = smul.addr %s1965, 8
          %s1967 = scalar_lea.vmem [#allocation10], %s1966
          %1968 = dma.done %s1964, 128
        $region72: #{tpu_custom_call.1} parent=67 // pred_fallthru
          _
      $region68: #{tpu_custom_call.1} parent=5 // pred_fallthru
        _
    $region6: #{tpu_custom_call.1} parent=1 // loop_footer
      %s26 = sadd.s32 1, %s22
    $region7: #{tpu_custom_call.1} parent=1 // loop_footer_branch
      %21 = sbr.rel target = $region3
    $region8: #{tpu_custom_call.1} parent=1 // loop_exit
      _
    %1969 = vsyncpa [#allocation3], 1
    %s1970 = scalar_lea.sflag [#allocation3], 1
    %1971 = vsyncpa %s1970, 1
    %1972 = vsyncpa [#allocation6], 1
    %s1973 = scalar_lea.sflag [#allocation6], 1
    %1974 = vsyncpa %s1973, 1
    %1975 = vsyncpa [#allocation9], 1
    %1976 = vsyncpa [#allocation4], 1
    %s1977 = scalar_lea.sflag [#allocation4], 1
    %1978 = vsyncpa %s1977, 1

</llo_original>
